<compile_context>
chip_gen: v7x
topology: tpu7x:2x2x1
jax: 0.10.0
libtpu: 0.0.40
codegen_flags: <defaults>
</compile_context>

<pallas_src>
import functools

import jax
import jax.numpy as jnp
from jax.experimental import pallas as pl
from jax.experimental.pallas import tpu as pltpu


def _layer_norm(x, gamma, beta, eps=1e-5):
    mean = jnp.mean(x, axis=-1, keepdims=True)
    var = jnp.mean((x - mean) ** 2, axis=-1, keepdims=True)
    return (x - mean) * jax.lax.rsqrt(var + eps) * gamma + beta


def encoder_kernel(x_ref,
                   ln1_g_ref, ln1_b_ref,
                   wq_ref, bq_ref, wkv_ref, bkv_ref, wo_ref, bo_ref,
                   ln2_g_ref, ln2_b_ref,
                   w1_ref, b1_ref, w2_ref, b2_ref,
                   o_ref,
                   k_scr, v_scr, xn_scr, ctx_scr,
                   *, num_heads, k_chunk):
    H = num_heads
    S = x_ref.shape[1]
    TQ = o_ref.shape[1]
    D = x_ref.shape[2]
    dh = D // H
    scale = 1.0 / (dh ** 0.5)
    KC = k_chunk
    n_kc = S // KC

    t = pl.program_id(1)

    # ---- per-batch setup (t == 0): LN1 + fused K/V projection, lane-dense ----
    @pl.when(t == 0)
    def _setup():
        xf = x_ref[0].astype(jnp.float32)                               # (S, D)
        xfn = _layer_norm(xf, ln1_g_ref[0], ln1_b_ref[0]).astype(jnp.bfloat16)
        xn_scr[...] = xfn                                               # cache LN1(x)
        kv = jnp.dot(xfn, wkv_ref[...],
                     preferred_element_type=jnp.float32) + bkv_ref[0]   # (S, 2D) f32
        k_scr[...] = kv[:, :D].astype(jnp.bfloat16)                     # full-width stores
        v_scr[...] = kv[:, D:].astype(jnp.bfloat16)

    # ---- sublayer 1: multi-head self-attention on this query tile ----
    q_start = pl.multiple_of(t * TQ, TQ)
    xt = x_ref[0, pl.ds(q_start, TQ), :].astype(jnp.float32)            # (TQ, D) residual
    xtn = xn_scr[pl.ds(q_start, TQ), :]                                 # cached LN1(x), bf16
    q = jnp.dot(xtn, wq_ref[...],
                preferred_element_type=jnp.float32) + bq_ref[0]         # (TQ, D) f32
    q = (q * scale).astype(jnp.bfloat16)                                # fold 1/sqrt(dh)

    # Per-head attention (H is small and static; each iteration ends in a
    # lane-slice store to ctx_scr, which bounds the head's live range).
    for h in range(H):
        qh = q[:, h * dh:(h + 1) * dh]                                  # (TQ, dh) bf16

        def body(c, carry, _qh=qh, _h=h):
            m, l, acc = carry
            ks = pl.multiple_of(c * KC, KC)
            kh = k_scr[pl.ds(ks, KC), _h * dh:(_h + 1) * dh]            # (KC, dh) bf16
            vh = v_scr[pl.ds(ks, KC), _h * dh:(_h + 1) * dh]
            s = jax.lax.dot_general(_qh, kh, (((1,), (1,)), ((), ())),
                                    preferred_element_type=jnp.float32)  # (TQ, KC)
            m_new = jnp.maximum(m, jnp.max(s, axis=-1, keepdims=True))
            alpha = jnp.exp(m - m_new)
            p = jnp.exp(s - m_new)                                      # f32 exp (v5e-safe)
            l_new = alpha * l + jnp.sum(p, axis=-1, keepdims=True)
            acc_new = alpha * acc + jnp.dot(p.astype(jnp.bfloat16), vh,
                                            preferred_element_type=jnp.float32)
            return m_new, l_new, acc_new

        m0 = jnp.full((TQ, 1), -jnp.inf, jnp.float32)
        l0 = jnp.zeros((TQ, 1), jnp.float32)
        a0 = jnp.zeros((TQ, dh), jnp.float32)
        if n_kc == 1:
            m_f, l_f, acc_f = body(0, (m0, l0, a0))
        else:
            m_f, l_f, acc_f = jax.lax.fori_loop(0, n_kc, body, (m0, l0, a0),
                                                unroll=(n_kc <= 4))
        ctx_h = acc_f * pl.reciprocal(l_f, approx=True)                 # (TQ, dh) f32
        ctx_scr[:, h * dh:(h + 1) * dh] = ctx_h.astype(jnp.bfloat16)

    attn = jnp.dot(ctx_scr[...], wo_ref[...],
                   preferred_element_type=jnp.float32) + bo_ref[0]      # (TQ, D) f32
    x1 = xt + attn                                                      # dropout == identity

    # ---- sublayer 2: MLP ----
    xn2 = _layer_norm(x1, ln2_g_ref[0], ln2_b_ref[0]).astype(jnp.bfloat16)
    h1 = jnp.dot(xn2, w1_ref[...],
                 preferred_element_type=jnp.float32) + b1_ref[0]
    h1 = jnp.maximum(h1, 0.0).astype(jnp.bfloat16)                      # ReLU
    h2 = jnp.dot(h1, w2_ref[...],
                 preferred_element_type=jnp.float32) + b2_ref[0]

    o_ref[0] = (x1 + h2).astype(o_ref.dtype)                            # dropout == identity


@functools.lru_cache(maxsize=1)
def _single_buffer_supported():
    """Trace/lowering-time check for pipeline_mode=pl.Buffered(1) support."""
    if not hasattr(pl, "Buffered"):
        return False
    try:
        spec = pl.BlockSpec((8, 128), lambda i: (0, 0),
                            pipeline_mode=pl.Buffered(1))

        def _k(w_ref, o_ref):
            o_ref[...] = w_ref[...] + 1.0

        fn = pl.pallas_call(
            _k,
            out_shape=jax.ShapeDtypeStruct((8, 128), jnp.float32),
            grid=(1,),
            in_specs=[spec],
            out_specs=pl.BlockSpec((8, 128), lambda i: (0, 0)),
        )
        jax.jit(fn).lower(jax.ShapeDtypeStruct((8, 128), jnp.float32))
        return True
    except Exception:
        return False


def _vmem_limit_bytes():
    """Generation-aware VMEM budget (64 MiB/TC on v7x, 128 MiB on v5e/v6e)."""
    try:
        cap = int(pltpu.get_tpu_info().vmem_capacity_bytes)
    except Exception:
        cap = 64 * 1024 * 1024          # conservative (v7x per-core)
    return min((cap * 3) // 4, 100 * 1024 * 1024)


def encoder_md(x, params, *, num_heads, q_tile=None, k_chunk=None):
    """x: (B, S, D) float32.  params: dict of weights (see init_params)."""
    B, S, D = x.shape
    Dff = params["w1"].shape[1]
    assert D % num_heads == 0

    # Query tile (must divide S; multiple of 8 unless == S).
    if q_tile is None:
        q_tile = 256 if S % 256 == 0 else S
    assert S % q_tile == 0 and (q_tile == S or q_tile % 8 == 0)
    n_tiles = S // q_tile

    # K chunk for the flash-style inner loop (must divide S).
    if k_chunk is None:
        k_chunk = 512 if S % 512 == 0 else (256 if S % 256 == 0 else S)
    assert S % k_chunk == 0 and (k_chunk == S or k_chunk % 8 == 0)

    # Host-side weight prep: fuse K/V projections, cast matmul weights to bf16.
    wkv = jnp.concatenate([params["wk"], params["wv"]], axis=1).astype(jnp.bfloat16)
    bkv = jnp.concatenate([params["bk"], params["bv"]], axis=1)
    wq = params["wq"].astype(jnp.bfloat16)
    wo = params["wo"].astype(jnp.bfloat16)
    w1 = params["w1"].astype(jnp.bfloat16)
    w2 = params["w2"].astype(jnp.bfloat16)

    single_buf = _single_buffer_supported()

    def wspec(shape):
        # Grid-invariant weights/biases: single-buffer when supported to halve
        # their VMEM footprint (decided once at lowering time, no fallback run).
        if single_buf:
            return pl.BlockSpec(shape, lambda b, t: (0, 0),
                                pipeline_mode=pl.Buffered(1))
        return pl.BlockSpec(shape, lambda b, t: (0, 0))

    in_specs = [
        pl.BlockSpec((1, S, D), lambda b, t: (b, 0, 0)),     # x (full sequence)
        wspec((1, D)), wspec((1, D)),                        # ln1 gamma/beta
        wspec((D, D)), wspec((1, D)),                        # wq, bq
        wspec((D, 2 * D)), wspec((1, 2 * D)),                # wkv, bkv
        wspec((D, D)), wspec((1, D)),                        # wo, bo
        wspec((1, D)), wspec((1, D)),                        # ln2 gamma/beta
        wspec((D, Dff)), wspec((1, Dff)),                    # w1, b1
        wspec((Dff, D)), wspec((1, D)),                      # w2, b2
    ]

    kernel = functools.partial(encoder_kernel, num_heads=num_heads,
                               k_chunk=k_chunk)

    return pl.pallas_call(
        kernel,
        out_shape=jax.ShapeDtypeStruct((B, S, D), x.dtype),
        grid_spec=pltpu.PrefetchScalarGridSpec(
            num_scalar_prefetch=0,
            grid=(B, n_tiles),
            in_specs=in_specs,
            out_specs=pl.BlockSpec((1, q_tile, D), lambda b, t: (b, t, 0)),
            scratch_shapes=[
                pltpu.VMEM((S, D), jnp.bfloat16),        # K (lane-dense)
                pltpu.VMEM((S, D), jnp.bfloat16),        # V (lane-dense)
                pltpu.VMEM((S, D), jnp.bfloat16),        # cached LN1(x)
                pltpu.VMEM((q_tile, D), jnp.bfloat16),   # ctx assembly (lane-dense)
            ]),
        compiler_params=pltpu.CompilerParams(
            dimension_semantics=("parallel", "arbitrary"),
            vmem_limit_bytes=_vmem_limit_bytes()),
    )(x,
      params["ln1_g"], params["ln1_b"],
      wq, params["bq"], wkv, bkv, wo, params["bo"],
      params["ln2_g"], params["ln2_b"],
      w1, params["b1"], w2, params["b2"])


def encoder_ref(x, params, *, num_heads):
    """Pure-JAX f32 reference for a sanity check."""
    def ln(v, g, b, eps=1e-5):
        m = v.mean(-1, keepdims=True)
        var = ((v - m) ** 2).mean(-1, keepdims=True)
        return (v - m) / jnp.sqrt(var + eps) * g + b

    B, S, D = x.shape
    H = num_heads
    dh = D // H
    xn = ln(x, params["ln1_g"][0], params["ln1_b"][0])
    q = xn @ params["wq"] + params["bq"][0]
    k = xn @ params["wk"] + params["bk"][0]
    v = xn @ params["wv"] + params["bv"][0]
    q = q.reshape(B, S, H, dh).transpose(0, 2, 1, 3)
    k = k.reshape(B, S, H, dh).transpose(0, 2, 1, 3)
    v = v.reshape(B, S, H, dh).transpose(0, 2, 1, 3)
    s = jnp.einsum("bhqd,bhkd->bhqk", q, k) / jnp.sqrt(dh)
    p = jax.nn.softmax(s, axis=-1)
    ctx = jnp.einsum("bhqk,bhkd->bhqd", p, v)
    ctx = ctx.transpose(0, 2, 1, 3).reshape(B, S, D)
    x1 = x + (ctx @ params["wo"] + params["bo"][0])
    xn2 = ln(x1, params["ln2_g"][0], params["ln2_b"][0])
    h1 = jax.nn.relu(xn2 @ params["w1"] + params["b1"][0])
    return x1 + (h1 @ params["w2"] + params["b2"][0])


def init_params(key, d_model, d_ff):
    ks = jax.random.split(key, 8)
    sd = 0.02
    return {
        "ln1_g": jnp.ones((1, d_model), jnp.float32),
        "ln1_b": jnp.zeros((1, d_model), jnp.float32),
        "wq": sd * jax.random.normal(ks[0], (d_model, d_model), jnp.float32),
        "bq": jnp.zeros((1, d_model), jnp.float32),
        "wk": sd * jax.random.normal(ks[1], (d_model, d_model), jnp.float32),
        "bk": jnp.zeros((1, d_model), jnp.float32),
        "wv": sd * jax.random.normal(ks[2], (d_model, d_model), jnp.float32),
        "bv": jnp.zeros((1, d_model), jnp.float32),
        "wo": sd * jax.random.normal(ks[3], (d_model, d_model), jnp.float32),
        "bo": jnp.zeros((1, d_model), jnp.float32),
        "ln2_g": jnp.ones((1, d_model), jnp.float32),
        "ln2_b": jnp.zeros((1, d_model), jnp.float32),
        "w1": sd * jax.random.normal(ks[4], (d_model, d_ff), jnp.float32),
        "b1": jnp.zeros((1, d_ff), jnp.float32),
        "w2": sd * jax.random.normal(ks[5], (d_ff, d_model), jnp.float32),
        "b2": jnp.zeros((1, d_model), jnp.float32),
    }


if __name__ == "__main__":
    B, S, D, H, Dff = 2, 8, 32, 4, 64
    key = jax.random.PRNGKey(0)
    kx, kp = jax.random.split(key)
    x = jax.random.normal(kx, (B, S, D), jnp.float32)
    params = init_params(kp, D, Dff)

    out = encoder_md(x, params, num_heads=H)
    jax.block_until_ready(out)
    assert out.shape == (B, S, D)

    ref = encoder_ref(x, params, num_heads=H)
    err = float(jnp.max(jnp.abs(out - ref)))
    assert err < 3e-2, f"kernel deviates from reference: max abs diff = {err}"
    print("KERNEL_OK")
</pallas_src>

<mosaic_0001>
module attributes {stable_mosaic.version = 11 : i64} {
  func.func @encoder_kernel(%arg0: i32, %arg1: i32, %arg2: memref<1x8x32xf32, #tpu.memory_space<vmem>>, %arg3: memref<1x32xf32, #tpu.memory_space<vmem>>, %arg4: memref<1x32xf32, #tpu.memory_space<vmem>>, %arg5: memref<32x32xbf16, #tpu.memory_space<vmem>>, %arg6: memref<1x32xf32, #tpu.memory_space<vmem>>, %arg7: memref<32x64xbf16, #tpu.memory_space<vmem>>, %arg8: memref<1x64xf32, #tpu.memory_space<vmem>>, %arg9: memref<32x32xbf16, #tpu.memory_space<vmem>>, %arg10: memref<1x32xf32, #tpu.memory_space<vmem>>, %arg11: memref<1x32xf32, #tpu.memory_space<vmem>>, %arg12: memref<1x32xf32, #tpu.memory_space<vmem>>, %arg13: memref<32x64xbf16, #tpu.memory_space<vmem>>, %arg14: memref<1x64xf32, #tpu.memory_space<vmem>>, %arg15: memref<64x32xbf16, #tpu.memory_space<vmem>>, %arg16: memref<1x32xf32, #tpu.memory_space<vmem>>, %arg17: memref<1x8x32xf32, #tpu.memory_space<vmem>>, %arg18: memref<8x32xbf16, #tpu.memory_space<vmem>>, %arg19: memref<8x32xbf16, #tpu.memory_space<vmem>>, %arg20: memref<8x32xbf16, #tpu.memory_space<vmem>>, %arg21: memref<8x32xbf16, #tpu.memory_space<vmem>>) attributes {dimension_semantics = [#tpu.dimension_semantics<parallel>, #tpu.dimension_semantics<arbitrary>], iteration_bounds = array<i64: 2, 1>, scalar_prefetch = 0 : i64, scratch_operands = 4 : i64, tpu.core_type = #tpu.core_type<tc>, window_params = [{transform_indices = @transform_0, window_bounds = array<i64: 1, 8, 32>}, {pipeline_mode = #tpu.pipeline_mode<synchronous>, transform_indices = @transform_1, window_bounds = array<i64: 1, 32>}, {pipeline_mode = #tpu.pipeline_mode<synchronous>, transform_indices = @transform_2, window_bounds = array<i64: 1, 32>}, {pipeline_mode = #tpu.pipeline_mode<synchronous>, transform_indices = @transform_3, window_bounds = array<i64: 32, 32>}, {pipeline_mode = #tpu.pipeline_mode<synchronous>, transform_indices = @transform_4, window_bounds = array<i64: 1, 32>}, {pipeline_mode = #tpu.pipeline_mode<synchronous>, transform_indices = @transform_5, window_bounds = array<i64: 32, 64>}, {pipeline_mode = #tpu.pipeline_mode<synchronous>, transform_indices = @transform_6, window_bounds = array<i64: 1, 64>}, {pipeline_mode = #tpu.pipeline_mode<synchronous>, transform_indices = @transform_7, window_bounds = array<i64: 32, 32>}, {pipeline_mode = #tpu.pipeline_mode<synchronous>, transform_indices = @transform_8, window_bounds = array<i64: 1, 32>}, {pipeline_mode = #tpu.pipeline_mode<synchronous>, transform_indices = @transform_9, window_bounds = array<i64: 1, 32>}, {pipeline_mode = #tpu.pipeline_mode<synchronous>, transform_indices = @transform_10, window_bounds = array<i64: 1, 32>}, {pipeline_mode = #tpu.pipeline_mode<synchronous>, transform_indices = @transform_11, window_bounds = array<i64: 32, 64>}, {pipeline_mode = #tpu.pipeline_mode<synchronous>, transform_indices = @transform_12, window_bounds = array<i64: 1, 64>}, {pipeline_mode = #tpu.pipeline_mode<synchronous>, transform_indices = @transform_13, window_bounds = array<i64: 64, 32>}, {pipeline_mode = #tpu.pipeline_mode<synchronous>, transform_indices = @transform_14, window_bounds = array<i64: 1, 32>}, {transform_indices = @transform_15, window_bounds = array<i64: 1, 8, 32>}]} {
    %c0_i32 = arith.constant 0 : i32
    %0 = arith.cmpi eq, %arg1, %c0_i32 : i32
    %1 = arith.extui %0 : i1 to i32
    %c0_i32_0 = arith.constant 0 : i32
    %2 = arith.cmpi ne, %1, %c0_i32_0 : i32
    scf.if %2 {
      %c0_83 = arith.constant 0 : index
      %c0_84 = arith.constant 0 : index
      %c0_85 = arith.constant 0 : index
      %207 = vector.load %arg2[%c0_83, %c0_84, %c0_85] : memref<1x8x32xf32, #tpu.memory_space<vmem>>, vector<1x8x32xf32>
      %208 = vector.shape_cast %207 : vector<1x8x32xf32> to vector<8x32xf32>
      %c0_86 = arith.constant 0 : index
      %c0_87 = arith.constant 0 : index
      %209 = vector.load %arg3[%c0_86, %c0_87] : memref<1x32xf32, #tpu.memory_space<vmem>>, vector<1x32xf32>
      %210 = vector.shape_cast %209 : vector<1x32xf32> to vector<32xf32>
      %c0_88 = arith.constant 0 : index
      %c0_89 = arith.constant 0 : index
      %211 = vector.load %arg4[%c0_88, %c0_89] : memref<1x32xf32, #tpu.memory_space<vmem>>, vector<1x32xf32>
      %212 = vector.shape_cast %211 : vector<1x32xf32> to vector<32xf32>
      %cst_90 = arith.constant dense<0.000000e+00> : vector<8xf32>
      %213 = vector.multi_reduction <add>, %208, %cst_90 [1] : vector<8x32xf32> to vector<8xf32>
      %214 = vector.shape_cast %213 : vector<8xf32> to vector<8x1xf32>
      %cst_91 = arith.constant 3.200000e+01 : f32
      %215 = vector.broadcast %cst_91 : f32 to vector<8x1xf32>
      %216 = arith.divf %214, %215 : vector<8x1xf32>
      %217 = vector.broadcast %216 : vector<8x1xf32> to vector<8x32xf32>
      %218 = arith.subf %208, %217 : vector<8x32xf32>
      %219 = arith.mulf %218, %218 : vector<8x32xf32>
      %cst_92 = arith.constant dense<0.000000e+00> : vector<8xf32>
      %220 = vector.multi_reduction <add>, %219, %cst_92 [1] : vector<8x32xf32> to vector<8xf32>
      %221 = vector.shape_cast %220 : vector<8xf32> to vector<8x1xf32>
      %cst_93 = arith.constant 3.200000e+01 : f32
      %222 = vector.broadcast %cst_93 : f32 to vector<8x1xf32>
      %223 = arith.divf %221, %222 : vector<8x1xf32>
      %224 = vector.broadcast %216 : vector<8x1xf32> to vector<8x32xf32>
      %225 = arith.subf %208, %224 : vector<8x32xf32>
      %cst_94 = arith.constant 9.99999974E-6 : f32
      %226 = vector.broadcast %cst_94 : f32 to vector<8x1xf32>
      %227 = arith.addf %223, %226 : vector<8x1xf32>
      %228 = math.rsqrt %227 : vector<8x1xf32>
      %229 = vector.broadcast %228 : vector<8x1xf32> to vector<8x32xf32>
      %230 = arith.mulf %225, %229 : vector<8x32xf32>
      %231 = vector.shape_cast %210 : vector<32xf32> to vector<1x32xf32>
      %232 = vector.broadcast %231 : vector<1x32xf32> to vector<8x32xf32>
      %233 = arith.mulf %230, %232 : vector<8x32xf32>
      %234 = vector.shape_cast %212 : vector<32xf32> to vector<1x32xf32>
      %235 = vector.broadcast %234 : vector<1x32xf32> to vector<8x32xf32>
      %236 = arith.addf %233, %235 : vector<8x32xf32>
      %237 = arith.truncf %236 : vector<8x32xf32> to vector<8x32xbf16>
      %c0_95 = arith.constant 0 : index
      %c0_96 = arith.constant 0 : index
      %238 = vector.load %arg20[%c0_95, %c0_96] : memref<8x32xbf16, #tpu.memory_space<vmem>>, vector<8x32xbf16>
      tpu.vector_store %arg20[%c0_95, %c0_96], %237 {strides = array<i32>} : memref<8x32xbf16, #tpu.memory_space<vmem>>, vector<8x32xbf16>,
      %c0_97 = arith.constant 0 : index
      %c0_98 = arith.constant 0 : index
      %239 = vector.load %arg7[%c0_97, %c0_98] : memref<32x64xbf16, #tpu.memory_space<vmem>>, vector<32x64xbf16>
      %cst_99 = arith.constant dense<0.000000e+00> : vector<8x64xf32>
      %240 = tpu.matmul %237, %239, %cst_99 {dimension_numbers = #tpu.dot_dimension_numbers<[1], [0], [0], [1], [0, 0, 1, 1], [], []>} : vector<8x32xbf16>, vector<32x64xbf16>, vector<8x64xf32> -> vector<8x64xf32>
      %c0_100 = arith.constant 0 : index
      %c0_101 = arith.constant 0 : index
      %241 = vector.load %arg8[%c0_100, %c0_101] : memref<1x64xf32, #tpu.memory_space<vmem>>, vector<1x64xf32>
      %242 = vector.shape_cast %241 : vector<1x64xf32> to vector<64xf32>
      %243 = vector.shape_cast %242 : vector<64xf32> to vector<1x64xf32>
      %244 = vector.broadcast %243 : vector<1x64xf32> to vector<8x64xf32>
      %245 = arith.addf %240, %244 : vector<8x64xf32>
      %246 = vector.extract_strided_slice %245 {offsets = [0, 0], sizes = [8, 32], strides = [1, 1]} : vector<8x64xf32> to vector<8x32xf32>
      %247 = arith.truncf %246 : vector<8x32xf32> to vector<8x32xbf16>
      %c0_102 = arith.constant 0 : index
      %c0_103 = arith.constant 0 : index
      %248 = vector.load %arg18[%c0_102, %c0_103] : memref<8x32xbf16, #tpu.memory_space<vmem>>, vector<8x32xbf16>
      tpu.vector_store %arg18[%c0_102, %c0_103], %247 {strides = array<i32>} : memref<8x32xbf16, #tpu.memory_space<vmem>>, vector<8x32xbf16>,
      %249 = vector.extract_strided_slice %245 {offsets = [0, 32], sizes = [8, 32], strides = [1, 1]} : vector<8x64xf32> to vector<8x32xf32>
      %250 = arith.truncf %249 : vector<8x32xf32> to vector<8x32xbf16>
      %c0_104 = arith.constant 0 : index
      %c0_105 = arith.constant 0 : index
      %251 = vector.load %arg19[%c0_104, %c0_105] : memref<8x32xbf16, #tpu.memory_space<vmem>>, vector<8x32xbf16>
      tpu.vector_store %arg19[%c0_104, %c0_105], %250 {strides = array<i32>} : memref<8x32xbf16, #tpu.memory_space<vmem>>, vector<8x32xbf16>,
    } else {
    }
    %c8_i32 = arith.constant 8 : i32
    %3 = arith.muli %arg1, %c8_i32 : i32
    %4 = tpu.assume_multiple %3, 8 : i32
    %c0 = arith.constant 0 : index
    %5 = arith.index_cast %4 : i32 to index
    %c0_1 = arith.constant 0 : index
    %6 = vector.load %arg2[%c0, %5, %c0_1] : memref<1x8x32xf32, #tpu.memory_space<vmem>>, vector<1x8x32xf32>
    %7 = vector.shape_cast %6 : vector<1x8x32xf32> to vector<8x32xf32>
    %8 = arith.index_cast %4 : i32 to index
    %c0_2 = arith.constant 0 : index
    %9 = vector.load %arg20[%8, %c0_2] : memref<8x32xbf16, #tpu.memory_space<vmem>>, vector<8x32xbf16>
    %c0_3 = arith.constant 0 : index
    %c0_4 = arith.constant 0 : index
    %10 = vector.load %arg5[%c0_3, %c0_4] : memref<32x32xbf16, #tpu.memory_space<vmem>>, vector<32x32xbf16>
    %cst = arith.constant dense<0.000000e+00> : vector<8x32xf32>
    %11 = tpu.matmul %9, %10, %cst {dimension_numbers = #tpu.dot_dimension_numbers<[1], [0], [0], [1], [0, 0, 1, 1], [], []>} : vector<8x32xbf16>, vector<32x32xbf16>, vector<8x32xf32> -> vector<8x32xf32>
    %c0_5 = arith.constant 0 : index
    %c0_6 = arith.constant 0 : index
    %12 = vector.load %arg6[%c0_5, %c0_6] : memref<1x32xf32, #tpu.memory_space<vmem>>, vector<1x32xf32>
    %13 = vector.shape_cast %12 : vector<1x32xf32> to vector<32xf32>
    %14 = vector.shape_cast %13 : vector<32xf32> to vector<1x32xf32>
    %15 = vector.broadcast %14 : vector<1x32xf32> to vector<8x32xf32>
    %16 = arith.addf %11, %15 : vector<8x32xf32>
    %cst_7 = arith.constant 0.353553385 : f32
    %17 = vector.broadcast %cst_7 : f32 to vector<8x32xf32>
    %18 = arith.mulf %16, %17 : vector<8x32xf32>
    %19 = arith.truncf %18 : vector<8x32xf32> to vector<8x32xbf16>
    %20 = vector.extract_strided_slice %19 {offsets = [0, 0], sizes = [8, 8], strides = [1, 1]} : vector<8x32xbf16> to vector<8x8xbf16>
    %cst_8 = arith.constant 0xFF800000 : f32
    %21 = vector.broadcast %cst_8 : f32 to vector<8x1xf32>
    %cst_9 = arith.constant 0.000000e+00 : f32
    %22 = vector.broadcast %cst_9 : f32 to vector<8x1xf32>
    %cst_10 = arith.constant 0.000000e+00 : f32
    %23 = vector.broadcast %cst_10 : f32 to vector<8x8xf32>
    %c0_i32_11 = arith.constant 0 : i32
    %24 = tpu.assume_multiple %c0_i32_11, 8 : i32
    %25 = arith.index_cast %24 : i32 to index
    %c0_12 = arith.constant 0 : index
    %26 = vector.load %arg18[%25, %c0_12] : memref<8x32xbf16, #tpu.memory_space<vmem>>, vector<8x8xbf16>
    %27 = arith.index_cast %24 : i32 to index
    %c0_13 = arith.constant 0 : index
    %28 = vector.load %arg19[%27, %c0_13] : memref<8x32xbf16, #tpu.memory_space<vmem>>, vector<8x8xbf16>
    %cst_14 = arith.constant dense<0.000000e+00> : vector<8x8xf32>
    %29 = tpu.matmul %20, %26, %cst_14 {dimension_numbers = #tpu.dot_dimension_numbers<[1], [1], [0], [0], [0, 0, 1, 0], [], []>} : vector<8x8xbf16>, vector<8x8xbf16>, vector<8x8xf32> -> vector<8x8xf32>
    %cst_15 = arith.constant dense<0xFF800000> : vector<8xf32>
    %30 = vector.multi_reduction <maximumf>, %29, %cst_15 [1] : vector<8x8xf32> to vector<8xf32>
    %31 = vector.shape_cast %30 : vector<8xf32> to vector<8x1xf32>
    %32 = arith.maximumf %21, %31 : vector<8x1xf32>
    %33 = arith.subf %21, %32 : vector<8x1xf32>
    %34 = math.exp %33 : vector<8x1xf32>
    %35 = vector.broadcast %32 : vector<8x1xf32> to vector<8x8xf32>
    %36 = arith.subf %29, %35 : vector<8x8xf32>
    %37 = math.exp %36 : vector<8x8xf32>
    %38 = arith.mulf %34, %22 : vector<8x1xf32>
    %cst_16 = arith.constant dense<0.000000e+00> : vector<8xf32>
    %39 = vector.multi_reduction <add>, %37, %cst_16 [1] : vector<8x8xf32> to vector<8xf32>
    %40 = vector.shape_cast %39 : vector<8xf32> to vector<8x1xf32>
    %41 = arith.addf %38, %40 : vector<8x1xf32>
    %42 = vector.broadcast %34 : vector<8x1xf32> to vector<8x8xf32>
    %43 = arith.mulf %42, %23 : vector<8x8xf32>
    %44 = arith.truncf %37 : vector<8x8xf32> to vector<8x8xbf16>
    %cst_17 = arith.constant dense<0.000000e+00> : vector<8x8xf32>
    %45 = tpu.matmul %44, %28, %cst_17 {dimension_numbers = #tpu.dot_dimension_numbers<[1], [0], [0], [1], [0, 0, 1, 1], [], []>} : vector<8x8xbf16>, vector<8x8xbf16>, vector<8x8xf32> -> vector<8x8xf32>
    %46 = arith.addf %43, %45 : vector<8x8xf32>
    %47 = tpu.reciprocal %41 {approx = true} : vector<8x1xf32> -> vector<8x1xf32>
    %48 = vector.broadcast %47 : vector<8x1xf32> to vector<8x8xf32>
    %49 = arith.mulf %46, %48 : vector<8x8xf32>
    %50 = arith.truncf %49 : vector<8x8xf32> to vector<8x8xbf16>
    %c0_18 = arith.constant 0 : index
    %c0_19 = arith.constant 0 : index
    %51 = vector.load %arg21[%c0_18, %c0_19] : memref<8x32xbf16, #tpu.memory_space<vmem>>, vector<8x8xbf16>
    tpu.vector_store %arg21[%c0_18, %c0_19], %50 {strides = array<i32>} : memref<8x32xbf16, #tpu.memory_space<vmem>>, vector<8x8xbf16>,
    %52 = vector.extract_strided_slice %19 {offsets = [0, 8], sizes = [8, 8], strides = [1, 1]} : vector<8x32xbf16> to vector<8x8xbf16>
    %cst_20 = arith.constant 0xFF800000 : f32
    %53 = vector.broadcast %cst_20 : f32 to vector<8x1xf32>
    %cst_21 = arith.constant 0.000000e+00 : f32
    %54 = vector.broadcast %cst_21 : f32 to vector<8x1xf32>
    %cst_22 = arith.constant 0.000000e+00 : f32
    %55 = vector.broadcast %cst_22 : f32 to vector<8x8xf32>
    %c0_i32_23 = arith.constant 0 : i32
    %56 = tpu.assume_multiple %c0_i32_23, 8 : i32
    %57 = arith.index_cast %56 : i32 to index
    %c8 = arith.constant 8 : index
    %58 = vector.load %arg18[%57, %c8] : memref<8x32xbf16, #tpu.memory_space<vmem>>, vector<8x8xbf16>
    %59 = arith.index_cast %56 : i32 to index
    %c8_24 = arith.constant 8 : index
    %60 = vector.load %arg19[%59, %c8_24] : memref<8x32xbf16, #tpu.memory_space<vmem>>, vector<8x8xbf16>
    %cst_25 = arith.constant dense<0.000000e+00> : vector<8x8xf32>
    %61 = tpu.matmul %52, %58, %cst_25 {dimension_numbers = #tpu.dot_dimension_numbers<[1], [1], [0], [0], [0, 0, 1, 0], [], []>} : vector<8x8xbf16>, vector<8x8xbf16>, vector<8x8xf32> -> vector<8x8xf32>
    %cst_26 = arith.constant dense<0xFF800000> : vector<8xf32>
    %62 = vector.multi_reduction <maximumf>, %61, %cst_26 [1] : vector<8x8xf32> to vector<8xf32>
    %63 = vector.shape_cast %62 : vector<8xf32> to vector<8x1xf32>
    %64 = arith.maximumf %53, %63 : vector<8x1xf32>
    %65 = arith.subf %53, %64 : vector<8x1xf32>
    %66 = math.exp %65 : vector<8x1xf32>
    %67 = vector.broadcast %64 : vector<8x1xf32> to vector<8x8xf32>
    %68 = arith.subf %61, %67 : vector<8x8xf32>
    %69 = math.exp %68 : vector<8x8xf32>
    %70 = arith.mulf %66, %54 : vector<8x1xf32>
    %cst_27 = arith.constant dense<0.000000e+00> : vector<8xf32>
    %71 = vector.multi_reduction <add>, %69, %cst_27 [1] : vector<8x8xf32> to vector<8xf32>
    %72 = vector.shape_cast %71 : vector<8xf32> to vector<8x1xf32>
    %73 = arith.addf %70, %72 : vector<8x1xf32>
    %74 = vector.broadcast %66 : vector<8x1xf32> to vector<8x8xf32>
    %75 = arith.mulf %74, %55 : vector<8x8xf32>
    %76 = arith.truncf %69 : vector<8x8xf32> to vector<8x8xbf16>
    %cst_28 = arith.constant dense<0.000000e+00> : vector<8x8xf32>
    %77 = tpu.matmul %76, %60, %cst_28 {dimension_numbers = #tpu.dot_dimension_numbers<[1], [0], [0], [1], [0, 0, 1, 1], [], []>} : vector<8x8xbf16>, vector<8x8xbf16>, vector<8x8xf32> -> vector<8x8xf32>
    %78 = arith.addf %75, %77 : vector<8x8xf32>
    %79 = tpu.reciprocal %73 {approx = true} : vector<8x1xf32> -> vector<8x1xf32>
    %80 = vector.broadcast %79 : vector<8x1xf32> to vector<8x8xf32>
    %81 = arith.mulf %78, %80 : vector<8x8xf32>
    %82 = arith.truncf %81 : vector<8x8xf32> to vector<8x8xbf16>
    %c0_29 = arith.constant 0 : index
    %c8_30 = arith.constant 8 : index
    %83 = vector.load %arg21[%c0_29, %c8_30] : memref<8x32xbf16, #tpu.memory_space<vmem>>, vector<8x8xbf16>
    tpu.vector_store %arg21[%c0_29, %c8_30], %82 {strides = array<i32>} : memref<8x32xbf16, #tpu.memory_space<vmem>>, vector<8x8xbf16>,
    %84 = vector.extract_strided_slice %19 {offsets = [0, 16], sizes = [8, 8], strides = [1, 1]} : vector<8x32xbf16> to vector<8x8xbf16>
    %cst_31 = arith.constant 0xFF800000 : f32
    %85 = vector.broadcast %cst_31 : f32 to vector<8x1xf32>
    %cst_32 = arith.constant 0.000000e+00 : f32
    %86 = vector.broadcast %cst_32 : f32 to vector<8x1xf32>
    %cst_33 = arith.constant 0.000000e+00 : f32
    %87 = vector.broadcast %cst_33 : f32 to vector<8x8xf32>
    %c0_i32_34 = arith.constant 0 : i32
    %88 = tpu.assume_multiple %c0_i32_34, 8 : i32
    %89 = arith.index_cast %88 : i32 to index
    %c16 = arith.constant 16 : index
    %90 = vector.load %arg18[%89, %c16] : memref<8x32xbf16, #tpu.memory_space<vmem>>, vector<8x8xbf16>
    %91 = arith.index_cast %88 : i32 to index
    %c16_35 = arith.constant 16 : index
    %92 = vector.load %arg19[%91, %c16_35] : memref<8x32xbf16, #tpu.memory_space<vmem>>, vector<8x8xbf16>
    %cst_36 = arith.constant dense<0.000000e+00> : vector<8x8xf32>
    %93 = tpu.matmul %84, %90, %cst_36 {dimension_numbers = #tpu.dot_dimension_numbers<[1], [1], [0], [0], [0, 0, 1, 0], [], []>} : vector<8x8xbf16>, vector<8x8xbf16>, vector<8x8xf32> -> vector<8x8xf32>
    %cst_37 = arith.constant dense<0xFF800000> : vector<8xf32>
    %94 = vector.multi_reduction <maximumf>, %93, %cst_37 [1] : vector<8x8xf32> to vector<8xf32>
    %95 = vector.shape_cast %94 : vector<8xf32> to vector<8x1xf32>
    %96 = arith.maximumf %85, %95 : vector<8x1xf32>
    %97 = arith.subf %85, %96 : vector<8x1xf32>
    %98 = math.exp %97 : vector<8x1xf32>
    %99 = vector.broadcast %96 : vector<8x1xf32> to vector<8x8xf32>
    %100 = arith.subf %93, %99 : vector<8x8xf32>
    %101 = math.exp %100 : vector<8x8xf32>
    %102 = arith.mulf %98, %86 : vector<8x1xf32>
    %cst_38 = arith.constant dense<0.000000e+00> : vector<8xf32>
    %103 = vector.multi_reduction <add>, %101, %cst_38 [1] : vector<8x8xf32> to vector<8xf32>
    %104 = vector.shape_cast %103 : vector<8xf32> to vector<8x1xf32>
    %105 = arith.addf %102, %104 : vector<8x1xf32>
    %106 = vector.broadcast %98 : vector<8x1xf32> to vector<8x8xf32>
    %107 = arith.mulf %106, %87 : vector<8x8xf32>
    %108 = arith.truncf %101 : vector<8x8xf32> to vector<8x8xbf16>
    %cst_39 = arith.constant dense<0.000000e+00> : vector<8x8xf32>
    %109 = tpu.matmul %108, %92, %cst_39 {dimension_numbers = #tpu.dot_dimension_numbers<[1], [0], [0], [1], [0, 0, 1, 1], [], []>} : vector<8x8xbf16>, vector<8x8xbf16>, vector<8x8xf32> -> vector<8x8xf32>
    %110 = arith.addf %107, %109 : vector<8x8xf32>
    %111 = tpu.reciprocal %105 {approx = true} : vector<8x1xf32> -> vector<8x1xf32>
    %112 = vector.broadcast %111 : vector<8x1xf32> to vector<8x8xf32>
    %113 = arith.mulf %110, %112 : vector<8x8xf32>
    %114 = arith.truncf %113 : vector<8x8xf32> to vector<8x8xbf16>
    %c0_40 = arith.constant 0 : index
    %c16_41 = arith.constant 16 : index
    %115 = vector.load %arg21[%c0_40, %c16_41] : memref<8x32xbf16, #tpu.memory_space<vmem>>, vector<8x8xbf16>
    tpu.vector_store %arg21[%c0_40, %c16_41], %114 {strides = array<i32>} : memref<8x32xbf16, #tpu.memory_space<vmem>>, vector<8x8xbf16>,
    %116 = vector.extract_strided_slice %19 {offsets = [0, 24], sizes = [8, 8], strides = [1, 1]} : vector<8x32xbf16> to vector<8x8xbf16>
    %cst_42 = arith.constant 0xFF800000 : f32
    %117 = vector.broadcast %cst_42 : f32 to vector<8x1xf32>
    %cst_43 = arith.constant 0.000000e+00 : f32
    %118 = vector.broadcast %cst_43 : f32 to vector<8x1xf32>
    %cst_44 = arith.constant 0.000000e+00 : f32
    %119 = vector.broadcast %cst_44 : f32 to vector<8x8xf32>
    %c0_i32_45 = arith.constant 0 : i32
    %120 = tpu.assume_multiple %c0_i32_45, 8 : i32
    %121 = arith.index_cast %120 : i32 to index
    %c24 = arith.constant 24 : index
    %122 = vector.load %arg18[%121, %c24] : memref<8x32xbf16, #tpu.memory_space<vmem>>, vector<8x8xbf16>
    %123 = arith.index_cast %120 : i32 to index
    %c24_46 = arith.constant 24 : index
    %124 = vector.load %arg19[%123, %c24_46] : memref<8x32xbf16, #tpu.memory_space<vmem>>, vector<8x8xbf16>
    %cst_47 = arith.constant dense<0.000000e+00> : vector<8x8xf32>
    %125 = tpu.matmul %116, %122, %cst_47 {dimension_numbers = #tpu.dot_dimension_numbers<[1], [1], [0], [0], [0, 0, 1, 0], [], []>} : vector<8x8xbf16>, vector<8x8xbf16>, vector<8x8xf32> -> vector<8x8xf32>
    %cst_48 = arith.constant dense<0xFF800000> : vector<8xf32>
    %126 = vector.multi_reduction <maximumf>, %125, %cst_48 [1] : vector<8x8xf32> to vector<8xf32>
    %127 = vector.shape_cast %126 : vector<8xf32> to vector<8x1xf32>
    %128 = arith.maximumf %117, %127 : vector<8x1xf32>
    %129 = arith.subf %117, %128 : vector<8x1xf32>
    %130 = math.exp %129 : vector<8x1xf32>
    %131 = vector.broadcast %128 : vector<8x1xf32> to vector<8x8xf32>
    %132 = arith.subf %125, %131 : vector<8x8xf32>
    %133 = math.exp %132 : vector<8x8xf32>
    %134 = arith.mulf %130, %118 : vector<8x1xf32>
    %cst_49 = arith.constant dense<0.000000e+00> : vector<8xf32>
    %135 = vector.multi_reduction <add>, %133, %cst_49 [1] : vector<8x8xf32> to vector<8xf32>
    %136 = vector.shape_cast %135 : vector<8xf32> to vector<8x1xf32>
    %137 = arith.addf %134, %136 : vector<8x1xf32>
    %138 = vector.broadcast %130 : vector<8x1xf32> to vector<8x8xf32>
    %139 = arith.mulf %138, %119 : vector<8x8xf32>
    %140 = arith.truncf %133 : vector<8x8xf32> to vector<8x8xbf16>
    %cst_50 = arith.constant dense<0.000000e+00> : vector<8x8xf32>
    %141 = tpu.matmul %140, %124, %cst_50 {dimension_numbers = #tpu.dot_dimension_numbers<[1], [0], [0], [1], [0, 0, 1, 1], [], []>} : vector<8x8xbf16>, vector<8x8xbf16>, vector<8x8xf32> -> vector<8x8xf32>
    %142 = arith.addf %139, %141 : vector<8x8xf32>
    %143 = tpu.reciprocal %137 {approx = true} : vector<8x1xf32> -> vector<8x1xf32>
    %144 = vector.broadcast %143 : vector<8x1xf32> to vector<8x8xf32>
    %145 = arith.mulf %142, %144 : vector<8x8xf32>
    %146 = arith.truncf %145 : vector<8x8xf32> to vector<8x8xbf16>
    %c0_51 = arith.constant 0 : index
    %c24_52 = arith.constant 24 : index
    %147 = vector.load %arg21[%c0_51, %c24_52] : memref<8x32xbf16, #tpu.memory_space<vmem>>, vector<8x8xbf16>
    tpu.vector_store %arg21[%c0_51, %c24_52], %146 {strides = array<i32>} : memref<8x32xbf16, #tpu.memory_space<vmem>>, vector<8x8xbf16>,
    %c0_53 = arith.constant 0 : index
    %c0_54 = arith.constant 0 : index
    %148 = vector.load %arg21[%c0_53, %c0_54] : memref<8x32xbf16, #tpu.memory_space<vmem>>, vector<8x32xbf16>
    %c0_55 = arith.constant 0 : index
    %c0_56 = arith.constant 0 : index
    %149 = vector.load %arg9[%c0_55, %c0_56] : memref<32x32xbf16, #tpu.memory_space<vmem>>, vector<32x32xbf16>
    %cst_57 = arith.constant dense<0.000000e+00> : vector<8x32xf32>
    %150 = tpu.matmul %148, %149, %cst_57 {dimension_numbers = #tpu.dot_dimension_numbers<[1], [0], [0], [1], [0, 0, 1, 1], [], []>} : vector<8x32xbf16>, vector<32x32xbf16>, vector<8x32xf32> -> vector<8x32xf32>
    %c0_58 = arith.constant 0 : index
    %c0_59 = arith.constant 0 : index
    %151 = vector.load %arg10[%c0_58, %c0_59] : memref<1x32xf32, #tpu.memory_space<vmem>>, vector<1x32xf32>
    %152 = vector.shape_cast %151 : vector<1x32xf32> to vector<32xf32>
    %153 = vector.shape_cast %152 : vector<32xf32> to vector<1x32xf32>
    %154 = vector.broadcast %153 : vector<1x32xf32> to vector<8x32xf32>
    %155 = arith.addf %150, %154 : vector<8x32xf32>
    %156 = arith.addf %7, %155 : vector<8x32xf32>
    %c0_60 = arith.constant 0 : index
    %c0_61 = arith.constant 0 : index
    %157 = vector.load %arg11[%c0_60, %c0_61] : memref<1x32xf32, #tpu.memory_space<vmem>>, vector<1x32xf32>
    %158 = vector.shape_cast %157 : vector<1x32xf32> to vector<32xf32>
    %c0_62 = arith.constant 0 : index
    %c0_63 = arith.constant 0 : index
    %159 = vector.load %arg12[%c0_62, %c0_63] : memref<1x32xf32, #tpu.memory_space<vmem>>, vector<1x32xf32>
    %160 = vector.shape_cast %159 : vector<1x32xf32> to vector<32xf32>
    %cst_64 = arith.constant dense<0.000000e+00> : vector<8xf32>
    %161 = vector.multi_reduction <add>, %156, %cst_64 [1] : vector<8x32xf32> to vector<8xf32>
    %162 = vector.shape_cast %161 : vector<8xf32> to vector<8x1xf32>
    %cst_65 = arith.constant 3.200000e+01 : f32
    %163 = vector.broadcast %cst_65 : f32 to vector<8x1xf32>
    %164 = arith.divf %162, %163 : vector<8x1xf32>
    %165 = vector.broadcast %164 : vector<8x1xf32> to vector<8x32xf32>
    %166 = arith.subf %156, %165 : vector<8x32xf32>
    %167 = arith.mulf %166, %166 : vector<8x32xf32>
    %cst_66 = arith.constant dense<0.000000e+00> : vector<8xf32>
    %168 = vector.multi_reduction <add>, %167, %cst_66 [1] : vector<8x32xf32> to vector<8xf32>
    %169 = vector.shape_cast %168 : vector<8xf32> to vector<8x1xf32>
    %cst_67 = arith.constant 3.200000e+01 : f32
    %170 = vector.broadcast %cst_67 : f32 to vector<8x1xf32>
    %171 = arith.divf %169, %170 : vector<8x1xf32>
    %172 = vector.broadcast %164 : vector<8x1xf32> to vector<8x32xf32>
    %173 = arith.subf %156, %172 : vector<8x32xf32>
    %cst_68 = arith.constant 9.99999974E-6 : f32
    %174 = vector.broadcast %cst_68 : f32 to vector<8x1xf32>
    %175 = arith.addf %171, %174 : vector<8x1xf32>
    %176 = math.rsqrt %175 : vector<8x1xf32>
    %177 = vector.broadcast %176 : vector<8x1xf32> to vector<8x32xf32>
    %178 = arith.mulf %173, %177 : vector<8x32xf32>
    %179 = vector.shape_cast %158 : vector<32xf32> to vector<1x32xf32>
    %180 = vector.broadcast %179 : vector<1x32xf32> to vector<8x32xf32>
    %181 = arith.mulf %178, %180 : vector<8x32xf32>
    %182 = vector.shape_cast %160 : vector<32xf32> to vector<1x32xf32>
    %183 = vector.broadcast %182 : vector<1x32xf32> to vector<8x32xf32>
    %184 = arith.addf %181, %183 : vector<8x32xf32>
    %185 = arith.truncf %184 : vector<8x32xf32> to vector<8x32xbf16>
    %c0_69 = arith.constant 0 : index
    %c0_70 = arith.constant 0 : index
    %186 = vector.load %arg13[%c0_69, %c0_70] : memref<32x64xbf16, #tpu.memory_space<vmem>>, vector<32x64xbf16>
    %cst_71 = arith.constant dense<0.000000e+00> : vector<8x64xf32>
    %187 = tpu.matmul %185, %186, %cst_71 {dimension_numbers = #tpu.dot_dimension_numbers<[1], [0], [0], [1], [0, 0, 1, 1], [], []>} : vector<8x32xbf16>, vector<32x64xbf16>, vector<8x64xf32> -> vector<8x64xf32>
    %c0_72 = arith.constant 0 : index
    %c0_73 = arith.constant 0 : index
    %188 = vector.load %arg14[%c0_72, %c0_73] : memref<1x64xf32, #tpu.memory_space<vmem>>, vector<1x64xf32>
    %189 = vector.shape_cast %188 : vector<1x64xf32> to vector<64xf32>
    %190 = vector.shape_cast %189 : vector<64xf32> to vector<1x64xf32>
    %191 = vector.broadcast %190 : vector<1x64xf32> to vector<8x64xf32>
    %192 = arith.addf %187, %191 : vector<8x64xf32>
    %cst_74 = arith.constant 0.000000e+00 : f32
    %193 = vector.broadcast %cst_74 : f32 to vector<8x64xf32>
    %194 = arith.maximumf %192, %193 : vector<8x64xf32>
    %195 = arith.truncf %194 : vector<8x64xf32> to vector<8x64xbf16>
    %c0_75 = arith.constant 0 : index
    %c0_76 = arith.constant 0 : index
    %196 = vector.load %arg15[%c0_75, %c0_76] : memref<64x32xbf16, #tpu.memory_space<vmem>>, vector<64x32xbf16>
    %cst_77 = arith.constant dense<0.000000e+00> : vector<8x32xf32>
    %197 = tpu.matmul %195, %196, %cst_77 {dimension_numbers = #tpu.dot_dimension_numbers<[1], [0], [0], [1], [0, 0, 1, 1], [], []>} : vector<8x64xbf16>, vector<64x32xbf16>, vector<8x32xf32> -> vector<8x32xf32>
    %c0_78 = arith.constant 0 : index
    %c0_79 = arith.constant 0 : index
    %198 = vector.load %arg16[%c0_78, %c0_79] : memref<1x32xf32, #tpu.memory_space<vmem>>, vector<1x32xf32>
    %199 = vector.shape_cast %198 : vector<1x32xf32> to vector<32xf32>
    %200 = vector.shape_cast %199 : vector<32xf32> to vector<1x32xf32>
    %201 = vector.broadcast %200 : vector<1x32xf32> to vector<8x32xf32>
    %202 = arith.addf %197, %201 : vector<8x32xf32>
    %203 = arith.addf %156, %202 : vector<8x32xf32>
    %c0_80 = arith.constant 0 : index
    %c0_81 = arith.constant 0 : index
    %c0_82 = arith.constant 0 : index
    %204 = vector.load %arg17[%c0_80, %c0_81, %c0_82] : memref<1x8x32xf32, #tpu.memory_space<vmem>>, vector<1x8x32xf32>
    %205 = vector.shape_cast %204 : vector<1x8x32xf32> to vector<8x32xf32>
    %206 = vector.shape_cast %203 : vector<8x32xf32> to vector<1x8x32xf32>
    tpu.vector_store %arg17[%c0_80, %c0_81, %c0_82], %206 {strides = array<i32>} : memref<1x8x32xf32, #tpu.memory_space<vmem>>, vector<1x8x32xf32>,
    return
  }
  func.func @transform_0(%arg0: i32, %arg1: i32) -> (i32, i32, i32) {
    %c0_i32 = arith.constant 0 : i32
    %c0_i32_0 = arith.constant 0 : i32
    %c0_i32_1 = arith.constant 0 : i32
    return %arg0, %c0_i32, %c0_i32_0 : i32, i32, i32
  }
  func.func @transform_1(%arg0: i32, %arg1: i32) -> (i32, i32) {
    %c0_i32 = arith.constant 0 : i32
    %c0_i32_0 = arith.constant 0 : i32
    %c0_i32_1 = arith.constant 0 : i32
    return %c0_i32, %c0_i32_0 : i32, i32
  }
  func.func @transform_2(%arg0: i32, %arg1: i32) -> (i32, i32) {
    %c0_i32 = arith.constant 0 : i32
    %c0_i32_0 = arith.constant 0 : i32
    %c0_i32_1 = arith.constant 0 : i32
    return %c0_i32, %c0_i32_0 : i32, i32
  }
  func.func @transform_3(%arg0: i32, %arg1: i32) -> (i32, i32) {
    %c0_i32 = arith.constant 0 : i32
    %c0_i32_0 = arith.constant 0 : i32
    %c0_i32_1 = arith.constant 0 : i32
    return %c0_i32, %c0_i32_0 : i32, i32
  }
  func.func @transform_4(%arg0: i32, %arg1: i32) -> (i32, i32) {
    %c0_i32 = arith.constant 0 : i32
    %c0_i32_0 = arith.constant 0 : i32
    %c0_i32_1 = arith.constant 0 : i32
    return %c0_i32, %c0_i32_0 : i32, i32
  }
  func.func @transform_5(%arg0: i32, %arg1: i32) -> (i32, i32) {
    %c0_i32 = arith.constant 0 : i32
    %c0_i32_0 = arith.constant 0 : i32
    %c0_i32_1 = arith.constant 0 : i32
    return %c0_i32, %c0_i32_0 : i32, i32
  }
  func.func @transform_6(%arg0: i32, %arg1: i32) -> (i32, i32) {
    %c0_i32 = arith.constant 0 : i32
    %c0_i32_0 = arith.constant 0 : i32
    %c0_i32_1 = arith.constant 0 : i32
    return %c0_i32, %c0_i32_0 : i32, i32
  }
  func.func @transform_7(%arg0: i32, %arg1: i32) -> (i32, i32) {
    %c0_i32 = arith.constant 0 : i32
    %c0_i32_0 = arith.constant 0 : i32
    %c0_i32_1 = arith.constant 0 : i32
    return %c0_i32, %c0_i32_0 : i32, i32
  }
  func.func @transform_8(%arg0: i32, %arg1: i32) -> (i32, i32) {
    %c0_i32 = arith.constant 0 : i32
    %c0_i32_0 = arith.constant 0 : i32
    %c0_i32_1 = arith.constant 0 : i32
    return %c0_i32, %c0_i32_0 : i32, i32
  }
  func.func @transform_9(%arg0: i32, %arg1: i32) -> (i32, i32) {
    %c0_i32 = arith.constant 0 : i32
    %c0_i32_0 = arith.constant 0 : i32
    %c0_i32_1 = arith.constant 0 : i32
    return %c0_i32, %c0_i32_0 : i32, i32
  }
  func.func @transform_10(%arg0: i32, %arg1: i32) -> (i32, i32) {
    %c0_i32 = arith.constant 0 : i32
    %c0_i32_0 = arith.constant 0 : i32
    %c0_i32_1 = arith.constant 0 : i32
    return %c0_i32, %c0_i32_0 : i32, i32
  }
  func.func @transform_11(%arg0: i32, %arg1: i32) -> (i32, i32) {
    %c0_i32 = arith.constant 0 : i32
    %c0_i32_0 = arith.constant 0 : i32
    %c0_i32_1 = arith.constant 0 : i32
    return %c0_i32, %c0_i32_0 : i32, i32
  }
  func.func @transform_12(%arg0: i32, %arg1: i32) -> (i32, i32) {
    %c0_i32 = arith.constant 0 : i32
    %c0_i32_0 = arith.constant 0 : i32
    %c0_i32_1 = arith.constant 0 : i32
    return %c0_i32, %c0_i32_0 : i32, i32
  }
  func.func @transform_13(%arg0: i32, %arg1: i32) -> (i32, i32) {
    %c0_i32 = arith.constant 0 : i32
    %c0_i32_0 = arith.constant 0 : i32
    %c0_i32_1 = arith.constant 0 : i32
    return %c0_i32, %c0_i32_0 : i32, i32
  }
  func.func @transform_14(%arg0: i32, %arg1: i32) -> (i32, i32) {
    %c0_i32 = arith.constant 0 : i32
    %c0_i32_0 = arith.constant 0 : i32
    %c0_i32_1 = arith.constant 0 : i32
    return %c0_i32, %c0_i32_0 : i32, i32
  }
  func.func @transform_15(%arg0: i32, %arg1: i32) -> (i32, i32, i32) {
    %c0_i32 = arith.constant 0 : i32
    %c0_i32_0 = arith.constant 0 : i32
    return %arg0, %arg1, %c0_i32 : i32, i32, i32
  }
}

</mosaic_0001>

<llo_original>
// kernel: tpu_custom_call.1
$region0: #{tpu_custom_call.1}
  #allocation0 [shape = 'u32[]', space=smem, size = 0x4, offset = 0x4, fixed_abs, tag = 'smem constant byte address 0x4 - core index']
  #allocation1 [shape = 'u32[144,128]{1,0:T(1,128)}', space=vmem, size = 0x12000, scoped, tag = 'internal scratch']
  #allocation2 [shape = 'bf16[8,32]{1,0:T(8,128)(2,1)}', space=vmem, size = 0x800, scoped, tag = 'scratch operand']
  #allocation3 [shape = 'bf16[8,32]{1,0:T(8,128)(2,1)}', space=vmem, size = 0x800, scoped, tag = 'scratch operand']
  #allocation4 [shape = 'bf16[8,32]{1,0:T(8,128)(2,1)}', space=vmem, size = 0x800, scoped, tag = 'scratch operand']
  #allocation5 [shape = 'bf16[8,32]{1,0:T(8,128)(2,1)}', space=vmem, size = 0x800, scoped, tag = 'scratch operand']
  %s0 = inlined_call_operand.vmem [shape: f32[2,8,32], index: 0, kind: input, shape index: {}]
  %s1 = inlined_call_operand.vmem [shape: f32[1,32], index: 1, kind: input, shape index: {}]
  %s2 = inlined_call_operand.vmem [shape: f32[1,32], index: 2, kind: input, shape index: {}]
  %s3 = inlined_call_operand.vmem [shape: bf16[32,32], index: 3, kind: input, shape index: {}]
  %s4 = inlined_call_operand.hbm [shape: f32[1,32], index: 4, kind: input, shape index: {}]
  %s5 = inlined_call_operand.vmem [shape: bf16[32,64], index: 5, kind: input, shape index: {}]
  %s6 = inlined_call_operand.hbm [shape: f32[1,64], index: 6, kind: input, shape index: {}]
  %s7 = inlined_call_operand.hbm [shape: bf16[32,32], index: 7, kind: input, shape index: {}]
  %s8 = inlined_call_operand.hbm [shape: f32[1,32], index: 8, kind: input, shape index: {}]
  %s9 = inlined_call_operand.hbm [shape: f32[1,32], index: 9, kind: input, shape index: {}]
  %s10 = inlined_call_operand.vmem [shape: f32[1,32], index: 10, kind: input, shape index: {}]
  %s11 = inlined_call_operand.vmem [shape: bf16[32,64], index: 11, kind: input, shape index: {}]
  %s12 = inlined_call_operand.vmem [shape: f32[1,64], index: 12, kind: input, shape index: {}]
  %s13 = inlined_call_operand.vmem [shape: bf16[64,32], index: 13, kind: input, shape index: {}]
  %s14 = inlined_call_operand.vmem [shape: f32[1,32], index: 14, kind: input, shape index: {}]
  %s15 = inlined_call_operand.hbm [shape: f32[2,8,32], index: 15, kind: output, shape index: {}]
  %s16 = sld [smem:[#allocation0]]
  $region117: #{tpu_custom_call.1} parent=0
    _
  %s18 = ssub.s32 1, %s16
  %s19 = scalar_select 0, %s18, %s16
  $region1: #{tpu_custom_call.1} parent=0
    #allocation6 [shape = 'u8[512]{0}', space=vmem, size = 0x400, scoped, tag = 'input window, operand 4, single buffered']
    #allocation7 [shape = 's32[2]{0}', space=sflag, size = 0x8, scoped, tag = 'scoped memory for tpu_custom_call.1']
    #allocation8 [shape = 's32[2]{0}', space=sflag, size = 0x8, scoped, tag = 'scoped memory for tpu_custom_call.1']
    #allocation9 [shape = 'u8[512]{0}', space=vmem, size = 0x400, scoped, tag = 'input window, operand 6, single buffered']
    #allocation10 [shape = 's32[1]{0}', space=sflag, size = 0x4, scoped, tag = 'scoped memory for tpu_custom_call.1']
    #allocation11 [shape = 'u8[8192]{0}', space=vmem, size = 0x2000, scoped, tag = 'input window, operand 7, single buffered']
    #allocation12 [shape = 'u8[512]{0}', space=vmem, size = 0x400, scoped, tag = 'input window, operand 8, single buffered']
    #allocation13 [shape = 's32[1]{0}', space=sflag, size = 0x4, scoped, tag = 'scoped memory for tpu_custom_call.1']
    #allocation14 [shape = 'u8[512]{0}', space=vmem, size = 0x400, scoped, tag = 'input window, operand 9, single buffered']
    #allocation15 [shape = 'u8[8192]{0}', space=vmem, size = 0x2000, scoped, tag = 'output window, operand 0']
    %20 = vsyncpa [#allocation7], 0
    %21 = vsyncpa [#allocation10], 0
    %22 = vsyncpa [#allocation13], 0
    %23 = vsyncpa [#allocation8], 0
    %s24 = scalar_lea.sflag [#allocation8], 1
    %25 = vsyncpa %s24, 0
    loop: start=0, step=1, limit=4
    $region2: #{tpu_custom_call.1} parent=1 // loop_pre_header
      _
    $region3: #{tpu_custom_call.1} parent=1 // loop_header
      %s27 = sphi 0, %s31
      %p28 = scmp.ge.s32.totalorder %s27, 4
      %s34 = sphi 0, %s46
      %s35 = sphi 0, %s42
      %s36 = sphi 0, %s34
      %s37 = sphi 0, %s35
      %s38 = sphi 0, %s36
      %s39 = sphi 0, %s37
      %s49 = sphi 0, %s51
      %s52 = sphi 0, %s49
      %s53 = sphi 0, %s52
      %s69 = sphi 0, %s53
      %s73 = sphi 0, %s73
      %s75 = sphi 0, %s73
      %s76 = sphi 0, %s75
      %s90 = sphi 0, %s76
      %s94 = sphi 0, %s94
      %s96 = sphi 0, %s94
      %s97 = sphi 0, %s96
      %s111 = sphi 0, %s97
      %s115 = sphi 0, %s115
      %s117 = sphi 0, %s115
      %s118 = sphi 0, %s117
      %s132 = sphi 0, %s118
      %s136 = sphi 0, %s136
      %s138 = sphi 0, %s136
      %s139 = sphi 0, %s138
      %s153 = sphi 0, %s139
      %s157 = sphi 0, %s157
      %s159 = sphi 0, %s157
      %s160 = sphi 0, %s159
      %s174 = sphi 0, %s160
      %s178 = sphi 0, %s178
      %s180 = sphi 0, %s178
      %s181 = sphi 0, %s180
      %s195 = sphi 0, %s181
      %s199 = sphi 0, %s199
      %s201 = sphi 0, %s199
      %s202 = sphi 0, %s201
      %s216 = sphi 0, %s202
      %s220 = sphi 0, %s220
      %s222 = sphi 0, %s220
      %s223 = sphi 0, %s222
      %s237 = sphi 0, %s223
      %s241 = sphi 0, %s241
      %s243 = sphi 0, %s241
      %s244 = sphi 0, %s243
      %s258 = sphi 0, %s244
      %s262 = sphi 0, %s262
      %s264 = sphi 0, %s262
      %s265 = sphi 0, %s264
      %s279 = sphi 0, %s265
      %s283 = sphi 0, %s283
      %s285 = sphi 0, %s283
      %s286 = sphi 0, %s285
      %s300 = sphi 0, %s286
      %s304 = sphi 0, %s304
      %s306 = sphi 0, %s304
      %s307 = sphi 0, %s306
      %s321 = sphi 0, %s307
      %s325 = sphi 0, %s325
      %s327 = sphi 0, %s325
      %s328 = sphi 0, %s327
      %s342 = sphi 0, %s328
      %s346 = sphi 0, %s346
      %s348 = sphi 0, %s346
      %s349 = sphi 0, %s348
      %s363 = sphi 0, %s349
      %s371 = sphi 0, %s373
      %s374 = sphi 0, %s371
      %s375 = sphi 0, %s374
      %s391 = sphi 0, %s375
    $region4: #{tpu_custom_call.1} parent=1 // loop_header_branch
      %30 = sbr.rel (%p28) target = $region8
    $region5: #{tpu_custom_call.1} parent=1 // loop_body
      %s32 = ssub.s32 %s27, 1
      %s33 = ssub.s32 %s27, 2
      %s40 = sadd.s32 1, %s35
      %p41 = scmp.ge.s32.totalorder %s40, 1
      %s42 = scalar_select %p41, 0, %s40
      %s43 = sadd.s32 1, %s34
      %s44 = scalar_select %p41, %s43, %s34
      %p45 = scmp.ge.s32.totalorder %s44, 2
      %s46 = scalar_select %p45, 0, %s44
      %s47 = ssub.s32 %s34, %s46
      %p48 = scmp.eq.s32.totalorder %s47, 0
      %s50 = sadd.s32 %s49, 1
      %s51 = scalar_select %p48, %s49, %s50
      %p54 = pneg %p48
      %p55 = scmp.eq.s32.totalorder %s27, 1
      %p56 = por %p54, %p55
      %p57 = scmp.ne.s32.totalorder %s49, %s52
      %p58 = scmp.eq.s32.totalorder %s27, 0
      %p59 = por %p57, %p58
      %p60 = scmp.ne.s32.totalorder %s49, %s52
      %p61 = scmp.eq.s32.totalorder %s32, 1
      %p62 = por %p60, %p61
      %p63 = scmp.ne.s32.totalorder %s52, %s53
      %p64 = scmp.eq.s32.totalorder %s32, 0
      %p65 = por %p63, %p64
      %p66 = scmp.ne.s32.totalorder %s52, %s53
      %p67 = scmp.eq.s32.totalorder %s33, 1
      %p68 = por %p66, %p67
      %p70 = scmp.ne.s32.totalorder %s53, %s69
      %p71 = scmp.eq.s32.totalorder %s33, 0
      %p72 = por %p70, %p71
      %s74 = sadd.s32 %s73, 1
      %p77 = scmp.eq.s32.totalorder %s27, 1
      %p78 = scmp.ne.s32.totalorder %s73, %s75
      %p79 = scmp.eq.s32.totalorder %s27, 0
      %p80 = por %p78, %p79
      %p81 = scmp.ne.s32.totalorder %s73, %s75
      %p82 = scmp.eq.s32.totalorder %s32, 1
      %p83 = por %p81, %p82
      %p84 = scmp.ne.s32.totalorder %s75, %s76
      %p85 = scmp.eq.s32.totalorder %s32, 0
      %p86 = por %p84, %p85
      %p87 = scmp.ne.s32.totalorder %s75, %s76
      %p88 = scmp.eq.s32.totalorder %s33, 1
      %p89 = por %p87, %p88
      %p91 = scmp.ne.s32.totalorder %s76, %s90
      %p92 = scmp.eq.s32.totalorder %s33, 0
      %p93 = por %p91, %p92
      %s95 = sadd.s32 %s94, 1
      %p98 = scmp.eq.s32.totalorder %s27, 1
      %p99 = scmp.ne.s32.totalorder %s94, %s96
      %p100 = scmp.eq.s32.totalorder %s27, 0
      %p101 = por %p99, %p100
      %p102 = scmp.ne.s32.totalorder %s94, %s96
      %p103 = scmp.eq.s32.totalorder %s32, 1
      %p104 = por %p102, %p103
      %p105 = scmp.ne.s32.totalorder %s96, %s97
      %p106 = scmp.eq.s32.totalorder %s32, 0
      %p107 = por %p105, %p106
      %p108 = scmp.ne.s32.totalorder %s96, %s97
      %p109 = scmp.eq.s32.totalorder %s33, 1
      %p110 = por %p108, %p109
      %p112 = scmp.ne.s32.totalorder %s97, %s111
      %p113 = scmp.eq.s32.totalorder %s33, 0
      %p114 = por %p112, %p113
      %s116 = sadd.s32 %s115, 1
      %p119 = scmp.eq.s32.totalorder %s27, 1
      %p120 = scmp.ne.s32.totalorder %s115, %s117
      %p121 = scmp.eq.s32.totalorder %s27, 0
      %p122 = por %p120, %p121
      %p123 = scmp.ne.s32.totalorder %s115, %s117
      %p124 = scmp.eq.s32.totalorder %s32, 1
      %p125 = por %p123, %p124
      %p126 = scmp.ne.s32.totalorder %s117, %s118
      %p127 = scmp.eq.s32.totalorder %s32, 0
      %p128 = por %p126, %p127
      %p129 = scmp.ne.s32.totalorder %s117, %s118
      %p130 = scmp.eq.s32.totalorder %s33, 1
      %p131 = por %p129, %p130
      %p133 = scmp.ne.s32.totalorder %s118, %s132
      %p134 = scmp.eq.s32.totalorder %s33, 0
      %p135 = por %p133, %p134
      %s137 = sadd.s32 %s136, 1
      %p140 = scmp.eq.s32.totalorder %s27, 1
      %p141 = scmp.ne.s32.totalorder %s136, %s138
      %p142 = scmp.eq.s32.totalorder %s27, 0
      %p143 = por %p141, %p142
      %p144 = scmp.ne.s32.totalorder %s136, %s138
      %p145 = scmp.eq.s32.totalorder %s32, 1
      %p146 = por %p144, %p145
      %p147 = scmp.ne.s32.totalorder %s138, %s139
      %p148 = scmp.eq.s32.totalorder %s32, 0
      %p149 = por %p147, %p148
      %p150 = scmp.ne.s32.totalorder %s138, %s139
      %p151 = scmp.eq.s32.totalorder %s33, 1
      %p152 = por %p150, %p151
      %p154 = scmp.ne.s32.totalorder %s139, %s153
      %p155 = scmp.eq.s32.totalorder %s33, 0
      %p156 = por %p154, %p155
      %s158 = sadd.s32 %s157, 1
      %p161 = scmp.eq.s32.totalorder %s27, 1
      %p162 = scmp.ne.s32.totalorder %s157, %s159
      %p163 = scmp.eq.s32.totalorder %s27, 0
      %p164 = por %p162, %p163
      %p165 = scmp.ne.s32.totalorder %s157, %s159
      %p166 = scmp.eq.s32.totalorder %s32, 1
      %p167 = por %p165, %p166
      %p168 = scmp.ne.s32.totalorder %s159, %s160
      %p169 = scmp.eq.s32.totalorder %s32, 0
      %p170 = por %p168, %p169
      %p171 = scmp.ne.s32.totalorder %s159, %s160
      %p172 = scmp.eq.s32.totalorder %s33, 1
      %p173 = por %p171, %p172
      %p175 = scmp.ne.s32.totalorder %s160, %s174
      %p176 = scmp.eq.s32.totalorder %s33, 0
      %p177 = por %p175, %p176
      %s179 = sadd.s32 %s178, 1
      %p182 = scmp.eq.s32.totalorder %s27, 1
      %p183 = scmp.ne.s32.totalorder %s178, %s180
      %p184 = scmp.eq.s32.totalorder %s27, 0
      %p185 = por %p183, %p184
      %p186 = scmp.ne.s32.totalorder %s178, %s180
      %p187 = scmp.eq.s32.totalorder %s32, 1
      %p188 = por %p186, %p187
      %p189 = scmp.ne.s32.totalorder %s180, %s181
      %p190 = scmp.eq.s32.totalorder %s32, 0
      %p191 = por %p189, %p190
      %p192 = scmp.ne.s32.totalorder %s180, %s181
      %p193 = scmp.eq.s32.totalorder %s33, 1
      %p194 = por %p192, %p193
      %p196 = scmp.ne.s32.totalorder %s181, %s195
      %p197 = scmp.eq.s32.totalorder %s33, 0
      %p198 = por %p196, %p197
      %s200 = sadd.s32 %s199, 1
      %p203 = scmp.eq.s32.totalorder %s27, 1
      %p204 = scmp.ne.s32.totalorder %s199, %s201
      %p205 = scmp.eq.s32.totalorder %s27, 0
      %p206 = por %p204, %p205
      %p207 = scmp.ne.s32.totalorder %s199, %s201
      %p208 = scmp.eq.s32.totalorder %s32, 1
      %p209 = por %p207, %p208
      %p210 = scmp.ne.s32.totalorder %s201, %s202
      %p211 = scmp.eq.s32.totalorder %s32, 0
      %p212 = por %p210, %p211
      %p213 = scmp.ne.s32.totalorder %s201, %s202
      %p214 = scmp.eq.s32.totalorder %s33, 1
      %p215 = por %p213, %p214
      %p217 = scmp.ne.s32.totalorder %s202, %s216
      %p218 = scmp.eq.s32.totalorder %s33, 0
      %p219 = por %p217, %p218
      %s221 = sadd.s32 %s220, 1
      %p224 = scmp.eq.s32.totalorder %s27, 1
      %p225 = scmp.ne.s32.totalorder %s220, %s222
      %p226 = scmp.eq.s32.totalorder %s27, 0
      %p227 = por %p225, %p226
      %p228 = scmp.ne.s32.totalorder %s220, %s222
      %p229 = scmp.eq.s32.totalorder %s32, 1
      %p230 = por %p228, %p229
      %p231 = scmp.ne.s32.totalorder %s222, %s223
      %p232 = scmp.eq.s32.totalorder %s32, 0
      %p233 = por %p231, %p232
      %p234 = scmp.ne.s32.totalorder %s222, %s223
      %p235 = scmp.eq.s32.totalorder %s33, 1
      %p236 = por %p234, %p235
      %p238 = scmp.ne.s32.totalorder %s223, %s237
      %p239 = scmp.eq.s32.totalorder %s33, 0
      %p240 = por %p238, %p239
      %s242 = sadd.s32 %s241, 1
      %p245 = scmp.eq.s32.totalorder %s27, 1
      %p246 = scmp.ne.s32.totalorder %s241, %s243
      %p247 = scmp.eq.s32.totalorder %s27, 0
      %p248 = por %p246, %p247
      %p249 = scmp.ne.s32.totalorder %s241, %s243
      %p250 = scmp.eq.s32.totalorder %s32, 1
      %p251 = por %p249, %p250
      %p252 = scmp.ne.s32.totalorder %s243, %s244
      %p253 = scmp.eq.s32.totalorder %s32, 0
      %p254 = por %p252, %p253
      %p255 = scmp.ne.s32.totalorder %s243, %s244
      %p256 = scmp.eq.s32.totalorder %s33, 1
      %p257 = por %p255, %p256
      %p259 = scmp.ne.s32.totalorder %s244, %s258
      %p260 = scmp.eq.s32.totalorder %s33, 0
      %p261 = por %p259, %p260
      %s263 = sadd.s32 %s262, 1
      %p266 = scmp.eq.s32.totalorder %s27, 1
      %p267 = scmp.ne.s32.totalorder %s262, %s264
      %p268 = scmp.eq.s32.totalorder %s27, 0
      %p269 = por %p267, %p268
      %p270 = scmp.ne.s32.totalorder %s262, %s264
      %p271 = scmp.eq.s32.totalorder %s32, 1
      %p272 = por %p270, %p271
      %p273 = scmp.ne.s32.totalorder %s264, %s265
      %p274 = scmp.eq.s32.totalorder %s32, 0
      %p275 = por %p273, %p274
      %p276 = scmp.ne.s32.totalorder %s264, %s265
      %p277 = scmp.eq.s32.totalorder %s33, 1
      %p278 = por %p276, %p277
      %p280 = scmp.ne.s32.totalorder %s265, %s279
      %p281 = scmp.eq.s32.totalorder %s33, 0
      %p282 = por %p280, %p281
      %s284 = sadd.s32 %s283, 1
      %p287 = scmp.eq.s32.totalorder %s27, 1
      %p288 = scmp.ne.s32.totalorder %s283, %s285
      %p289 = scmp.eq.s32.totalorder %s27, 0
      %p290 = por %p288, %p289
      %p291 = scmp.ne.s32.totalorder %s283, %s285
      %p292 = scmp.eq.s32.totalorder %s32, 1
      %p293 = por %p291, %p292
      %p294 = scmp.ne.s32.totalorder %s285, %s286
      %p295 = scmp.eq.s32.totalorder %s32, 0
      %p296 = por %p294, %p295
      %p297 = scmp.ne.s32.totalorder %s285, %s286
      %p298 = scmp.eq.s32.totalorder %s33, 1
      %p299 = por %p297, %p298
      %p301 = scmp.ne.s32.totalorder %s286, %s300
      %p302 = scmp.eq.s32.totalorder %s33, 0
      %p303 = por %p301, %p302
      %s305 = sadd.s32 %s304, 1
      %p308 = scmp.eq.s32.totalorder %s27, 1
      %p309 = scmp.ne.s32.totalorder %s304, %s306
      %p310 = scmp.eq.s32.totalorder %s27, 0
      %p311 = por %p309, %p310
      %p312 = scmp.ne.s32.totalorder %s304, %s306
      %p313 = scmp.eq.s32.totalorder %s32, 1
      %p314 = por %p312, %p313
      %p315 = scmp.ne.s32.totalorder %s306, %s307
      %p316 = scmp.eq.s32.totalorder %s32, 0
      %p317 = por %p315, %p316
      %p318 = scmp.ne.s32.totalorder %s306, %s307
      %p319 = scmp.eq.s32.totalorder %s33, 1
      %p320 = por %p318, %p319
      %p322 = scmp.ne.s32.totalorder %s307, %s321
      %p323 = scmp.eq.s32.totalorder %s33, 0
      %p324 = por %p322, %p323
      %s326 = sadd.s32 %s325, 1
      %p329 = scmp.eq.s32.totalorder %s27, 1
      %p330 = scmp.ne.s32.totalorder %s325, %s327
      %p331 = scmp.eq.s32.totalorder %s27, 0
      %p332 = por %p330, %p331
      %p333 = scmp.ne.s32.totalorder %s325, %s327
      %p334 = scmp.eq.s32.totalorder %s32, 1
      %p335 = por %p333, %p334
      %p336 = scmp.ne.s32.totalorder %s327, %s328
      %p337 = scmp.eq.s32.totalorder %s32, 0
      %p338 = por %p336, %p337
      %p339 = scmp.ne.s32.totalorder %s327, %s328
      %p340 = scmp.eq.s32.totalorder %s33, 1
      %p341 = por %p339, %p340
      %p343 = scmp.ne.s32.totalorder %s328, %s342
      %p344 = scmp.eq.s32.totalorder %s33, 0
      %p345 = por %p343, %p344
      %s347 = sadd.s32 %s346, 1
      %p350 = scmp.eq.s32.totalorder %s27, 1
      %p351 = scmp.ne.s32.totalorder %s346, %s348
      %p352 = scmp.eq.s32.totalorder %s27, 0
      %p353 = por %p351, %p352
      %p354 = scmp.ne.s32.totalorder %s346, %s348
      %p355 = scmp.eq.s32.totalorder %s32, 1
      %p356 = por %p354, %p355
      %p357 = scmp.ne.s32.totalorder %s348, %s349
      %p358 = scmp.eq.s32.totalorder %s32, 0
      %p359 = por %p357, %p358
      %p360 = scmp.ne.s32.totalorder %s348, %s349
      %p361 = scmp.eq.s32.totalorder %s33, 1
      %p362 = por %p360, %p361
      %p364 = scmp.ne.s32.totalorder %s349, %s363
      %p365 = scmp.eq.s32.totalorder %s33, 0
      %p366 = por %p364, %p365
      %s367 = ssub.s32 %s34, %s46
      %s368 = ssub.s32 %s35, %s42
      %s369 = sor.u32 %s367, %s368
      %p370 = scmp.eq.s32.totalorder %s369, 0
      %s372 = sadd.s32 %s371, 1
      %s373 = scalar_select %p370, %s371, %s372
      %p376 = pneg %p370
      %p377 = scmp.eq.s32.totalorder %s27, 1
      %p378 = por %p376, %p377
      %p379 = scmp.ne.s32.totalorder %s371, %s374
      %p380 = scmp.eq.s32.totalorder %s27, 0
      %p381 = por %p379, %p380
      %p382 = scmp.ne.s32.totalorder %s371, %s374
      %p383 = scmp.eq.s32.totalorder %s32, 1
      %p384 = por %p382, %p383
      %p385 = scmp.ne.s32.totalorder %s374, %s375
      %p386 = scmp.eq.s32.totalorder %s32, 0
      %p387 = por %p385, %p386
      %p388 = scmp.ne.s32.totalorder %s374, %s375
      %p389 = scmp.eq.s32.totalorder %s33, 1
      %p390 = por %p388, %p389
      %p392 = scmp.ne.s32.totalorder %s375, %s391
      %p393 = scmp.eq.s32.totalorder %s33, 0
      %p394 = por %p392, %p393
      %p395 = scmp.le.s32.totalorder 1, %s27
      %p396 = scmp.lt.s32.totalorder %s27, 3
      %p397 = pnand %p395, %p396
      %p398 = pneg %p397
      // Predicated region
      $region9: #{tpu_custom_call.1} parent=5 // pred_check
        _
      $region10: #{tpu_custom_call.1} parent=5 // pred_check_branch
        %400 = sbr.rel (%p397) target = $region12
      $region11: #{tpu_custom_call.1} parent=5 // pred_region
        %s401 = ssub.s32 %s27, 1
        // Predicated region
        $region13: #{tpu_custom_call.1} parent=11 // pred_check
          %p402 = pneg %p86
        $region14: #{tpu_custom_call.1} parent=11 // pred_check_branch
          %404 = sbr.rel (%p402) target = $region16
        $region15: #{tpu_custom_call.1} parent=11 // pred_region
          _
        $region16: #{tpu_custom_call.1} parent=11 // pred_fallthru
          _
        // Predicated region
        $region17: #{tpu_custom_call.1} parent=11 // pred_check
          %p405 = pneg %p107
        $region18: #{tpu_custom_call.1} parent=11 // pred_check_branch
          %407 = sbr.rel (%p405) target = $region20
        $region19: #{tpu_custom_call.1} parent=11 // pred_region
          _
        $region20: #{tpu_custom_call.1} parent=11 // pred_fallthru
          _
        // Predicated region
        $region21: #{tpu_custom_call.1} parent=11 // pred_check
          %p408 = pneg %p128
        $region22: #{tpu_custom_call.1} parent=11 // pred_check_branch
          %410 = sbr.rel (%p408) target = $region24
        $region23: #{tpu_custom_call.1} parent=11 // pred_region
          _
        $region24: #{tpu_custom_call.1} parent=11 // pred_fallthru
          _
        // Predicated region
        $region25: #{tpu_custom_call.1} parent=11 // pred_check
          %p411 = pneg %p149
        $region26: #{tpu_custom_call.1} parent=11 // pred_check_branch
          %413 = sbr.rel (%p411) target = $region28
        $region27: #{tpu_custom_call.1} parent=11 // pred_region
          %s415 = ssub.s32 16, 16
          %416 = vsyncadd [#allocation7], %s415
          %s418 = sshll.u32 [#allocation6], 4
          %s419 = int_to_ptr.vmem [resolvable:$true] %s418
          %421 = dma.hbm_to_vmem [thread:$0]  %s4, 16, %s419, [#allocation7]
        $region28: #{tpu_custom_call.1} parent=11 // pred_fallthru
          _
        // Predicated region
        $region29: #{tpu_custom_call.1} parent=11 // pred_check
          %p422 = pneg %p170
        $region30: #{tpu_custom_call.1} parent=11 // pred_check_branch
          %424 = sbr.rel (%p422) target = $region32
        $region31: #{tpu_custom_call.1} parent=11 // pred_region
          _
        $region32: #{tpu_custom_call.1} parent=11 // pred_fallthru
          _
        // Predicated region
        $region33: #{tpu_custom_call.1} parent=11 // pred_check
          %p425 = pneg %p191
        $region34: #{tpu_custom_call.1} parent=11 // pred_check_branch
          %427 = sbr.rel (%p425) target = $region36
        $region35: #{tpu_custom_call.1} parent=11 // pred_region
          %s429 = ssub.s32 16, 16
          %430 = vsyncadd [#allocation10], %s429
          %s432 = sshll.u32 [#allocation9], 4
          %s433 = int_to_ptr.vmem [resolvable:$true] %s432
          %435 = dma.hbm_to_vmem [thread:$0]  %s6, 16, %s433, [#allocation10]
        $region36: #{tpu_custom_call.1} parent=11 // pred_fallthru
          _
        // Predicated region
        $region37: #{tpu_custom_call.1} parent=11 // pred_check
          %p436 = pneg %p212
        $region38: #{tpu_custom_call.1} parent=11 // pred_check_branch
          %438 = sbr.rel (%p436) target = $region40
        $region39: #{tpu_custom_call.1} parent=11 // pred_region
          %s440 = ssub.s32 256, 256
          %441 = vsyncadd [#allocation10], %s440
          %s442 = sshll.u32 [#allocation11], 4
          %s443 = int_to_ptr.vmem [resolvable:$true] %s442
          %448 = dma.hbm_to_vmem [thread:$0]  %s7, 256, %s443, [#allocation10], 64, 64, 4
        $region40: #{tpu_custom_call.1} parent=11 // pred_fallthru
          _
        // Predicated region
        $region41: #{tpu_custom_call.1} parent=11 // pred_check
          %p449 = pneg %p233
        $region42: #{tpu_custom_call.1} parent=11 // pred_check_branch
          %451 = sbr.rel (%p449) target = $region44
        $region43: #{tpu_custom_call.1} parent=11 // pred_region
          %s453 = ssub.s32 16, 16
          %454 = vsyncadd [#allocation13], %s453
          %s456 = sshll.u32 [#allocation12], 4
          %s457 = int_to_ptr.vmem [resolvable:$true] %s456
          %459 = dma.hbm_to_vmem [thread:$0]  %s8, 16, %s457, [#allocation13]
        $region44: #{tpu_custom_call.1} parent=11 // pred_fallthru
          _
        // Predicated region
        $region45: #{tpu_custom_call.1} parent=11 // pred_check
          %p460 = pneg %p254
        $region46: #{tpu_custom_call.1} parent=11 // pred_check_branch
          %462 = sbr.rel (%p460) target = $region48
        $region47: #{tpu_custom_call.1} parent=11 // pred_region
          %s464 = ssub.s32 16, 16
          %465 = vsyncadd [#allocation13], %s464
          %s467 = sshll.u32 [#allocation14], 4
          %s468 = int_to_ptr.vmem [resolvable:$true] %s467
          %470 = dma.hbm_to_vmem [thread:$0]  %s9, 16, %s468, [#allocation13]
        $region48: #{tpu_custom_call.1} parent=11 // pred_fallthru
          _
        // Predicated region
        $region49: #{tpu_custom_call.1} parent=11 // pred_check
          %p471 = pneg %p275
        $region50: #{tpu_custom_call.1} parent=11 // pred_check_branch
          %473 = sbr.rel (%p471) target = $region52
        $region51: #{tpu_custom_call.1} parent=11 // pred_region
          _
        $region52: #{tpu_custom_call.1} parent=11 // pred_fallthru
          _
        // Predicated region
        $region53: #{tpu_custom_call.1} parent=11 // pred_check
          %p474 = pneg %p296
        $region54: #{tpu_custom_call.1} parent=11 // pred_check_branch
          %476 = sbr.rel (%p474) target = $region56
        $region55: #{tpu_custom_call.1} parent=11 // pred_region
          _
        $region56: #{tpu_custom_call.1} parent=11 // pred_fallthru
          _
        // Predicated region
        $region57: #{tpu_custom_call.1} parent=11 // pred_check
          %p477 = pneg %p317
        $region58: #{tpu_custom_call.1} parent=11 // pred_check_branch
          %479 = sbr.rel (%p477) target = $region60
        $region59: #{tpu_custom_call.1} parent=11 // pred_region
          _
        $region60: #{tpu_custom_call.1} parent=11 // pred_fallthru
          _
        // Predicated region
        $region61: #{tpu_custom_call.1} parent=11 // pred_check
          %p480 = pneg %p338
        $region62: #{tpu_custom_call.1} parent=11 // pred_check_branch
          %482 = sbr.rel (%p480) target = $region64
        $region63: #{tpu_custom_call.1} parent=11 // pred_region
          _
        $region64: #{tpu_custom_call.1} parent=11 // pred_fallthru
          _
        // Predicated region
        $region65: #{tpu_custom_call.1} parent=11 // pred_check
          %p483 = pneg %p359
        $region66: #{tpu_custom_call.1} parent=11 // pred_check_branch
          %485 = sbr.rel (%p483) target = $region68
        $region67: #{tpu_custom_call.1} parent=11 // pred_region
          _
        $region68: #{tpu_custom_call.1} parent=11 // pred_fallthru
          _
      $region12: #{tpu_custom_call.1} parent=5 // pred_fallthru
        _
      %p486 = scmp.lt.s32.totalorder %s27, 2
      // Predicated region
      $region69: #{tpu_custom_call.1} parent=5 // pred_check
        %p487 = pneg %p486
      $region70: #{tpu_custom_call.1} parent=5 // pred_check_branch
        %489 = sbr.rel (%p487) target = $region72
      $region71: #{tpu_custom_call.1} parent=5 // pred_region
        // Predicated region
        $region73: #{tpu_custom_call.1} parent=71 // pred_check
          %p490 = pneg %p59
        $region74: #{tpu_custom_call.1} parent=71 // pred_check_branch
          %492 = sbr.rel (%p490) target = $region76
        $region75: #{tpu_custom_call.1} parent=71 // pred_region
          %p493 = scmp.lt.s32.totalorder %s34, 1
          %s494 = scalar_select %p493, %s34, 1
          %s495 = smul.addr %s494, 8
          %s496 = scalar_lea.vmem %s0, %s495
        $region76: #{tpu_custom_call.1} parent=71 // pred_fallthru
          _
      $region72: #{tpu_custom_call.1} parent=5 // pred_fallthru
        _
      %p497 = scmp.le.s32.totalorder 1, %s27
      %p498 = scmp.lt.s32.totalorder %s27, 3
      %p499 = pnand %p497, %p498
      %p500 = pneg %p499
      // Predicated region
      $region77: #{tpu_custom_call.1} parent=5 // pred_check
        _
      $region78: #{tpu_custom_call.1} parent=5 // pred_check_branch
        %502 = sbr.rel (%p499) target = $region80
      $region79: #{tpu_custom_call.1} parent=5 // pred_region
        %s503 = ssub.s32 %s27, 1
        // Predicated region
        $region81: #{tpu_custom_call.1} parent=79 // pred_check
          %p504 = pneg %p149
        $region82: #{tpu_custom_call.1} parent=79 // pred_check_branch
          %506 = sbr.rel (%p504) target = $region84
        $region83: #{tpu_custom_call.1} parent=79 // pred_region
          %507 = dma.done [#allocation7], 16
        $region84: #{tpu_custom_call.1} parent=79 // pred_fallthru
          _
        // Predicated region
        $region85: #{tpu_custom_call.1} parent=79 // pred_check
          %p508 = pneg %p191
        $region86: #{tpu_custom_call.1} parent=79 // pred_check_branch
          %510 = sbr.rel (%p508) target = $region88
        $region87: #{tpu_custom_call.1} parent=79 // pred_region
          %511 = dma.done [#allocation10], 16
        $region88: #{tpu_custom_call.1} parent=79 // pred_fallthru
          _
        // Predicated region
        $region89: #{tpu_custom_call.1} parent=79 // pred_check
          %p512 = pneg %p212
        $region90: #{tpu_custom_call.1} parent=79 // pred_check_branch
          %514 = sbr.rel (%p512) target = $region92
        $region91: #{tpu_custom_call.1} parent=79 // pred_region
          %515 = dma.done [#allocation10], 256
        $region92: #{tpu_custom_call.1} parent=79 // pred_fallthru
          _
        // Predicated region
        $region93: #{tpu_custom_call.1} parent=79 // pred_check
          %p516 = pneg %p233
        $region94: #{tpu_custom_call.1} parent=79 // pred_check_branch
          %518 = sbr.rel (%p516) target = $region96
        $region95: #{tpu_custom_call.1} parent=79 // pred_region
          %519 = dma.done [#allocation13], 16
        $region96: #{tpu_custom_call.1} parent=79 // pred_fallthru
          _
        // Predicated region
        $region97: #{tpu_custom_call.1} parent=79 // pred_check
          %p520 = pneg %p254
        $region98: #{tpu_custom_call.1} parent=79 // pred_check_branch
          %522 = sbr.rel (%p520) target = $region100
        $region99: #{tpu_custom_call.1} parent=79 // pred_region
          %523 = dma.done [#allocation13], 16
        $region100: #{tpu_custom_call.1} parent=79 // pred_fallthru
          _
        %p524 = scmp.lt.s32.totalorder %s36, 1
        %s525 = scalar_select %p524, %s36, 1
        %s526 = smul.addr %s525, 8
        %s527 = scalar_lea.vmem %s0, %s526
        %p528 = pneg %p65
        %p529 = pneg %p62
        %p530 = pneg %p86
        %p531 = pneg %p83
        %p532 = pneg %p107
        %p533 = pneg %p104
        %p534 = pneg %p128
        %p535 = pneg %p125
        %p536 = pneg %p149
        %p537 = pneg %p146
        %p538 = pneg %p170
        %p539 = pneg %p167
        %p540 = pneg %p191
        %p541 = pneg %p188
        %p542 = pneg %p212
        %p543 = pneg %p209
        %p544 = pneg %p233
        %p545 = pneg %p230
        %p546 = pneg %p254
        %p547 = pneg %p251
        %p548 = pneg %p275
        %p549 = pneg %p272
        %p550 = pneg %p296
        %p551 = pneg %p293
        %p552 = pneg %p317
        %p553 = pneg %p314
        %p554 = pneg %p338
        %p555 = pneg %p335
        %p556 = pneg %p359
        %p557 = pneg %p356
        %p558 = pneg %p387
        %p559 = pneg %p384
        %s560 = sand.u32 %s374, 1
        %s561 = scalar_lea.sflag [#allocation8], %s560
        %s562 = sand.u32 %s374, 1
        %s563 = smul.addr %s562, 8
        %s564 = scalar_lea.vmem [#allocation15], %s563
        %p565 = scmp.lt.s32.totalorder %s36, 1
        %s566 = scalar_select %p565, %s36, 1
        %s567 = smul.addr %s566, 8
        %s568 = scalar_lea.vmem %s0, %s567
        %p570 = scmp.eq.s32.totalorder %s37, 0
        // Predicated region
        $region101: #{tpu_custom_call.1} parent=79 // pred_check
          %p571 = pneg %p570
        $region102: #{tpu_custom_call.1} parent=79 // pred_check_branch
          %573 = sbr.rel (%p571) target = $region104
        $region103: #{tpu_custom_call.1} parent=79 // pred_region
          %v574 = vld [vmem:[%s568] sm:$0xff]
          %v575 = vld [vmem:[%s1] sm:$0x1]
          %v576 = vld [vmem:[%s2] sm:$0x1]
          %vm577 = vcmask 261120
          %v578 = vsel %vm577, %v574, 0.0
          %579 = vadd.xlane.f32.xlu0 %v578
          %v580 = vpop.xlane.xlu0 %579
          %v581 = vrcp.pop 32.0
          %v582 = vmul.f32 %v580, %v581
          %v583 = vsub.f32 %v574, %v582
          %v584 = vmul.f32 %v583, %v583
          %v585 = vsel %vm577, %v584, 0.0
          %586 = vadd.xlane.f32.xlu0 %v585
          %v587 = vpop.xlane.xlu0 %586
          %v588 = vmul.f32 %v587, %v581
          %v589 = vadd.f32 %v588, 1e-05
          %v590 = vrsqrt.pop %v589
          %v591 = vmul.f32 %v583, %v590
          %v593 = vlaneseq
          %v594 = vshrl.u32 %v593, 7
          %v595 = vsub.s32 0, %v594
          %v596 = vrot.slane %v575, %v595
          %v598 = vmul.f32 %v591, %v596
          %v600 = vlaneseq
          %v601 = vshrl.u32 %v600, 7
          %v602 = vsub.s32 0, %v601
          %v603 = vrot.slane %v576, %v602
          %v605 = vadd.f32 %v598, %v603
          %v606 = vpack.c.bf16 %v605, %v605
          %vm607 = vcmask 257024
          %608 = vst.msk [vmem:[#allocation4] sm:$0xf] %vm607, %v606
          %v609 = vld [vmem:[%s5] sm:$0xf]
          %v610 = vld [vmem:[%s5 + $0x4] sm:$0xf]
          %v611 = vld [vmem:[%s5 + $0x8] sm:$0xf]
          %v612 = vld [vmem:[%s5 + $0xc] sm:$0xf]
          %v613 = vld [vmem:[#allocation9] sm:$0x1]
          %v615 = vlaneseq
          %v616 = vshrl.u32 %v615, 7
          %v617 = vsub.s32 0, %v616
          %v618 = vrot.slane %v613, %v617
          %v624 = vunpack.c.l.b16 %v609
          %v625 = vunpack.c.l.b16 %v610
          %v626 = vunpack.c.l.b16 %v611
          %v627 = vunpack.c.l.b16 %v612
          %v628 = vpack.c.b16 %v625, %v624
          %v629 = vpack.c.b16 %v627, %v626
          %v633 = vsel %vm577, %v606, 0
          %635 = vmatprep.subr.bf16.mxu0 0
          %636 = vmatpush1.bf16.msra.mxu0 %v628
          %637 = vmatprep.subr.bf16.mxu0 0
          %638 = vmatpush1.bf16.msra.mxu0 %v629
          %639 = vmatprep.subr.bf16.mxu0 0
          %640 = vmatpush1.bf16.msra.mxu0 0
          %641 = vmatprep.subr.bf16.mxu0 0
          %642 = vmatpush1.bf16.msra.mxu0 0
          %643 = vmatprep.subr.bf16.mxu0 0
          %644 = vmatpush1.bf16.msra.mxu0 0
          %645 = vmatprep.subr.bf16.mxu0 0
          %646 = vmatpush1.bf16.msra.mxu0 0
          %647 = vmatprep.subr.bf16.mxu0 0
          %648 = vmatpush1.bf16.msra.mxu0 0
          %649 = vmatprep.subr.bf16.mxu0 0
          %650 = vmatpush1.bf16.msra.mxu0 0
          %651 = vmatprep.subr.bf16.mxu0 0
          %652 = vmatpush1.bf16.msra.mxu0 0
          %653 = vmatprep.subr.bf16.mxu0 0
          %654 = vmatpush1.bf16.msra.mxu0 0
          %655 = vmatprep.subr.bf16.mxu0 0
          %656 = vmatpush1.bf16.msra.mxu0 0
          %657 = vmatprep.subr.bf16.mxu0 0
          %658 = vmatpush1.bf16.msra.mxu0 0
          %659 = vmatprep.subr.bf16.mxu0 0
          %660 = vmatpush1.bf16.msra.mxu0 0
          %661 = vmatprep.subr.bf16.mxu0 0
          %662 = vmatpush1.bf16.msra.mxu0 0
          %663 = vmatprep.subr.bf16.mxu0 0
          %664 = vmatpush1.bf16.msra.mxu0 0
          %665 = vmatprep.subr.bf16.mxu0 0
          %666 = vmatpush1.bf16.msra.mxu0 0
          %667 = vmatprep.mubr.bf16.mxu0 0
          %668 = vmatmul.mubr.bf16.gmra.mrb[0].mxu0 %v633
          %v669 = vpop.f32.mrb[0].mxu0
          %v670 = vadd.f32 %v618, %v669
          %v671 = vpop.f32.mrb[0].mxu0
          %v672 = vpop.f32.mrb[0].mxu0
          %v673 = vpop.f32.mrb[0].mxu0
          %674 = vdwg.mxu0
          %v675 = vpack.c.bf16 %v670, %v670
          %676 = vst.msk [vmem:[#allocation2] sm:$0xf] %vm607, %v675
          %v678 = vunpack.c.l.b16 %v675
          %v679 = vpack.c.b16 %v678, %v678
          %680 = vrot.lane.b32.xlu0 %v679, 96
          %v681 = vpop.permute.xlu0 %680
          %683 = vst.msk [vmem:[#allocation3] sm:$0xf] %vm607, %v681
        $region104: #{tpu_custom_call.1} parent=79 // pred_fallthru
          _
        %s684 = smul.u32 %s37, 8
        %s685 = scalar_lea.vmem %s568, %s684
        %v686 = vld [vmem:[%s685] sm:$0xff]
        %s687 = sshra.s32 %s684, 3
        %s688 = sand.u32 %s684, 7
        %s689 = smul.addr %s687, 4
        %s690 = scalar_lea.vmem [#allocation4], %s689
        %v691 = vld [vmem:[%s690] sm:$0xf]
        %v692 = vld [vmem:[%s3] sm:$0xf]
        %v693 = vld [vmem:[%s3 + $0x4] sm:$0xf]
        %v694 = vld [vmem:[%s3 + $0x8] sm:$0xf]
        %v695 = vld [vmem:[%s3 + $0xc] sm:$0xf]
        %v696 = vld [vmem:[#allocation6] sm:$0x1]
        %v698 = vlaneseq
        %v699 = vshrl.u32 %v698, 7
        %v700 = vsub.s32 0, %v699
        %v701 = vrot.slane %v696, %v700
        %v707 = vunpack.c.l.b16 %v692
        %v708 = vunpack.c.l.b16 %v693
        %v709 = vunpack.c.l.b16 %v694
        %v710 = vunpack.c.l.b16 %v695
        %v711 = vpack.c.b16 %v708, %v707
        %v712 = vpack.c.b16 %v710, %v709
        %vm715 = vcmask 261120
        %v717 = vsel %vm715, %v691, 0
        %719 = vmatprep.subr.bf16.mxu0 0
        %720 = vmatpush1.bf16.msra.mxu0 %v711
        %721 = vmatprep.subr.bf16.mxu0 0
        %722 = vmatpush1.bf16.msra.mxu0 %v712
        %723 = vmatprep.subr.bf16.mxu0 0
        %724 = vmatpush1.bf16.msra.mxu0 0
        %725 = vmatprep.subr.bf16.mxu0 0
        %726 = vmatpush1.bf16.msra.mxu0 0
        %727 = vmatprep.subr.bf16.mxu0 0
        %728 = vmatpush1.bf16.msra.mxu0 0
        %729 = vmatprep.subr.bf16.mxu0 0
        %730 = vmatpush1.bf16.msra.mxu0 0
        %731 = vmatprep.subr.bf16.mxu0 0
        %732 = vmatpush1.bf16.msra.mxu0 0
        %733 = vmatprep.subr.bf16.mxu0 0
        %734 = vmatpush1.bf16.msra.mxu0 0
        %735 = vmatprep.subr.bf16.mxu0 0
        %736 = vmatpush1.bf16.msra.mxu0 0
        %737 = vmatprep.subr.bf16.mxu0 0
        %738 = vmatpush1.bf16.msra.mxu0 0
        %739 = vmatprep.subr.bf16.mxu0 0
        %740 = vmatpush1.bf16.msra.mxu0 0
        %741 = vmatprep.subr.bf16.mxu0 0
        %742 = vmatpush1.bf16.msra.mxu0 0
        %743 = vmatprep.subr.bf16.mxu0 0
        %744 = vmatpush1.bf16.msra.mxu0 0
        %745 = vmatprep.subr.bf16.mxu0 0
        %746 = vmatpush1.bf16.msra.mxu0 0
        %747 = vmatprep.subr.bf16.mxu0 0
        %748 = vmatpush1.bf16.msra.mxu0 0
        %749 = vmatprep.subr.bf16.mxu0 0
        %750 = vmatpush1.bf16.msra.mxu0 0
        %751 = vmatprep.mubr.bf16.mxu0 0
        %752 = vmatmul.mubr.bf16.gmra.mrb[0].mxu0 %v717
        %v753 = vpop.f32.mrb[0].mxu0
        %v754 = vadd.f32 %v701, %v753
        %v755 = vpop.f32.mrb[0].mxu0
        %v756 = vpop.f32.mrb[0].mxu0
        %v757 = vpop.f32.mrb[0].mxu0
        %758 = vdwg.mxu0
        %v759 = vmul.f32 %v754, 0.35355338
        %v760 = vpack.c.bf16 %v759, %v759
        %v761 = vld [vmem:[#allocation2] sm:$0xf]
        %v762 = vld [vmem:[#allocation3] sm:$0xf]
        %vm763 = vcmask 64512
        %v765 = vsel %vm763, %v760, 0
        %v768 = vsel %vm763, %v761, 0
        %770 = vmatprep.subr.bf16.mxu0 0
        %771 = vmatpush1.bf16.xpose.msra.mxu0 %v768
        %772 = vmatprep.subr.bf16.mxu0 0
        %773 = vmatpush1.bf16.xpose.msra.mxu0 0
        %774 = vmatprep.subr.bf16.mxu0 0
        %775 = vmatpush1.bf16.xpose.msra.mxu0 0
        %776 = vmatprep.subr.bf16.mxu0 0
        %777 = vmatpush1.bf16.xpose.msra.mxu0 0
        %778 = vmatprep.subr.bf16.mxu0 0
        %779 = vmatpush1.bf16.xpose.msra.mxu0 0
        %780 = vmatprep.subr.bf16.mxu0 0
        %781 = vmatpush1.bf16.xpose.msra.mxu0 0
        %782 = vmatprep.subr.bf16.mxu0 0
        %783 = vmatpush1.bf16.xpose.msra.mxu0 0
        %784 = vmatprep.subr.bf16.mxu0 0
        %785 = vmatpush1.bf16.xpose.msra.mxu0 0
        %786 = vmatprep.subr.bf16.mxu0 0
        %787 = vmatpush1.bf16.xpose.msra.mxu0 0
        %788 = vmatprep.subr.bf16.mxu0 0
        %789 = vmatpush1.bf16.xpose.msra.mxu0 0
        %790 = vmatprep.subr.bf16.mxu0 0
        %791 = vmatpush1.bf16.xpose.msra.mxu0 0
        %792 = vmatprep.subr.bf16.mxu0 0
        %793 = vmatpush1.bf16.xpose.msra.mxu0 0
        %794 = vmatprep.subr.bf16.mxu0 0
        %795 = vmatpush1.bf16.xpose.msra.mxu0 0
        %796 = vmatprep.subr.bf16.mxu0 0
        %797 = vmatpush1.bf16.xpose.msra.mxu0 0
        %798 = vmatprep.subr.bf16.mxu0 0
        %799 = vmatpush1.bf16.xpose.msra.mxu0 0
        %800 = vmatprep.subr.bf16.mxu0 0
        %801 = vmatpush1.bf16.xpose.msra.mxu0 0
        %802 = vmatprep.mubr.bf16.mxu0 0
        %803 = vmatmul.mubr.bf16.gmra.mrb[0].mxu0 %v765
        %v804 = vpop.f32.mrb[0].mxu0
        %v805 = vadd.f32 0.0, %v804
        %v806 = vpop.f32.mrb[0].mxu0
        %v807 = vpop.f32.mrb[0].mxu0
        %v808 = vpop.f32.mrb[0].mxu0
        %809 = vdwg.mxu0
        %v810 = vsel %vm763, %v805, -inf
        %811 = vmax.xlane.f32.xlu0 %v810
        %v812 = vpop.xlane.xlu0 %811
        %v813 = vsub.f32 -inf, %v812
        %v814 = vmul.f32 %v813, 1.442695
        %v815 = vpow.pop %v814
        %v816 = vsub.f32 %v805, %v812
        %v817 = vmul.f32 %v816, 1.442695
        %v818 = vpow.pop %v817
        %v819 = vmul.f32 %v815, 0.0
        %v820 = vsel %vm763, %v818, 0.0
        %821 = vadd.xlane.f32.xlu0 %v820
        %v822 = vpop.xlane.xlu0 %821
        %v823 = vadd.f32 %v819, %v822
        %v824 = vpack.c.bf16 %v818, %v818
        %v826 = vsel %vm763, %v824, 0
        %vm828 = vcmask 1043456
        %v830 = vsel %vm828, %v762, 0
        %832 = vmatprep.subr.bf16.mxu0 0
        %833 = vmatpush1.bf16.msra.mxu0 %v830
        %834 = vmatprep.subr.bf16.mxu0 0
        %835 = vmatpush1.bf16.msra.mxu0 0
        %836 = vmatprep.subr.bf16.mxu0 0
        %837 = vmatpush1.bf16.msra.mxu0 0
        %838 = vmatprep.subr.bf16.mxu0 0
        %839 = vmatpush1.bf16.msra.mxu0 0
        %840 = vmatprep.subr.bf16.mxu0 0
        %841 = vmatpush1.bf16.msra.mxu0 0
        %842 = vmatprep.subr.bf16.mxu0 0
        %843 = vmatpush1.bf16.msra.mxu0 0
        %844 = vmatprep.subr.bf16.mxu0 0
        %845 = vmatpush1.bf16.msra.mxu0 0
        %846 = vmatprep.subr.bf16.mxu0 0
        %847 = vmatpush1.bf16.msra.mxu0 0
        %848 = vmatprep.subr.bf16.mxu0 0
        %849 = vmatpush1.bf16.msra.mxu0 0
        %850 = vmatprep.subr.bf16.mxu0 0
        %851 = vmatpush1.bf16.msra.mxu0 0
        %852 = vmatprep.subr.bf16.mxu0 0
        %853 = vmatpush1.bf16.msra.mxu0 0
        %854 = vmatprep.subr.bf16.mxu0 0
        %855 = vmatpush1.bf16.msra.mxu0 0
        %856 = vmatprep.subr.bf16.mxu0 0
        %857 = vmatpush1.bf16.msra.mxu0 0
        %858 = vmatprep.subr.bf16.mxu0 0
        %859 = vmatpush1.bf16.msra.mxu0 0
        %860 = vmatprep.subr.bf16.mxu0 0
        %861 = vmatpush1.bf16.msra.mxu0 0
        %862 = vmatprep.subr.bf16.mxu0 0
        %863 = vmatpush1.bf16.msra.mxu0 0
        %864 = vmatprep.mubr.bf16.mxu0 0
        %865 = vmatmul.mubr.bf16.gmra.mrb[0].mxu0 %v826
        %v866 = vpop.f32.mrb[0].mxu0
        %v867 = vadd.f32 0.0, %v866
        %v868 = vpop.f32.mrb[0].mxu0
        %v869 = vpop.f32.mrb[0].mxu0
        %v870 = vpop.f32.mrb[0].mxu0
        %871 = vdwg.mxu0
        %v872 = vadd.f32 %v819, %v867
        %v873 = vrcp.pop %v823
        %v874 = vmul.f32 %v872, %v873
        %v875 = vpack.c.bf16 %v874, %v874
        %vm876 = vcmask 60416
        %877 = vst.msk [vmem:[#allocation5] sm:$0xf] %vm876, %v875
        %v878 = vld [vmem:[#allocation2] sm:$0xf]
        %v879 = vld [vmem:[#allocation3] sm:$0xf]
        %881 = vrot.lane.b32.xlu0 %v760, 120
        %v882 = vpop.permute.xlu0 %881
        %v884 = vunpack.c.l.b16 %v878
        %v885 = vpack.c.b16 %v884, %v884
        %886 = vrot.lane.b32.xlu0 %v885, 120
        %v887 = vpop.permute.xlu0 %886
        %v889 = vsel %vm763, %v882, 0
        %v892 = vsel %vm763, %v887, 0
        %894 = vmatprep.subr.bf16.mxu0 0
        %895 = vmatpush1.bf16.xpose.msra.mxu0 %v892
        %896 = vmatprep.subr.bf16.mxu0 0
        %897 = vmatpush1.bf16.xpose.msra.mxu0 0
        %898 = vmatprep.subr.bf16.mxu0 0
        %899 = vmatpush1.bf16.xpose.msra.mxu0 0
        %900 = vmatprep.subr.bf16.mxu0 0
        %901 = vmatpush1.bf16.xpose.msra.mxu0 0
        %902 = vmatprep.subr.bf16.mxu0 0
        %903 = vmatpush1.bf16.xpose.msra.mxu0 0
        %904 = vmatprep.subr.bf16.mxu0 0
        %905 = vmatpush1.bf16.xpose.msra.mxu0 0
        %906 = vmatprep.subr.bf16.mxu0 0
        %907 = vmatpush1.bf16.xpose.msra.mxu0 0
        %908 = vmatprep.subr.bf16.mxu0 0
        %909 = vmatpush1.bf16.xpose.msra.mxu0 0
        %910 = vmatprep.subr.bf16.mxu0 0
        %911 = vmatpush1.bf16.xpose.msra.mxu0 0
        %912 = vmatprep.subr.bf16.mxu0 0
        %913 = vmatpush1.bf16.xpose.msra.mxu0 0
        %914 = vmatprep.subr.bf16.mxu0 0
        %915 = vmatpush1.bf16.xpose.msra.mxu0 0
        %916 = vmatprep.subr.bf16.mxu0 0
        %917 = vmatpush1.bf16.xpose.msra.mxu0 0
        %918 = vmatprep.subr.bf16.mxu0 0
        %919 = vmatpush1.bf16.xpose.msra.mxu0 0
        %920 = vmatprep.subr.bf16.mxu0 0
        %921 = vmatpush1.bf16.xpose.msra.mxu0 0
        %922 = vmatprep.subr.bf16.mxu0 0
        %923 = vmatpush1.bf16.xpose.msra.mxu0 0
        %924 = vmatprep.subr.bf16.mxu0 0
        %925 = vmatpush1.bf16.xpose.msra.mxu0 0
        %926 = vmatprep.mubr.bf16.mxu0 0
        %927 = vmatmul.mubr.bf16.gmra.mrb[0].mxu0 %v889
        %v928 = vpop.f32.mrb[0].mxu0
        %v929 = vadd.f32 0.0, %v928
        %v930 = vpop.f32.mrb[0].mxu0
        %v931 = vpop.f32.mrb[0].mxu0
        %v932 = vpop.f32.mrb[0].mxu0
        %933 = vdwg.mxu0
        %v934 = vsel %vm763, %v929, -inf
        %935 = vmax.xlane.f32.xlu0 %v934
        %v936 = vpop.xlane.xlu0 %935
        %v937 = vsub.f32 -inf, %v936
        %v938 = vmul.f32 %v937, 1.442695
        %v939 = vpow.pop %v938
        %v940 = vsub.f32 %v929, %v936
        %v941 = vmul.f32 %v940, 1.442695
        %v942 = vpow.pop %v941
        %v943 = vmul.f32 %v939, 0.0
        %v944 = vsel %vm763, %v942, 0.0
        %945 = vadd.xlane.f32.xlu0 %v944
        %v946 = vpop.xlane.xlu0 %945
        %v947 = vadd.f32 %v943, %v946
        %v948 = vpack.c.bf16 %v942, %v942
        %v950 = vunpack.c.l.b16 %v879
        %v951 = vpack.c.b16 %v950, %v950
        %952 = vrot.lane.b32.xlu0 %v951, 120
        %v953 = vpop.permute.xlu0 %952
        %v955 = vsel %vm763, %v948, 0
        %v958 = vsel %vm828, %v953, 0
        %960 = vmatprep.subr.bf16.mxu0 0
        %961 = vmatpush1.bf16.msra.mxu0 %v958
        %962 = vmatprep.subr.bf16.mxu0 0
        %963 = vmatpush1.bf16.msra.mxu0 0
        %964 = vmatprep.subr.bf16.mxu0 0
        %965 = vmatpush1.bf16.msra.mxu0 0
        %966 = vmatprep.subr.bf16.mxu0 0
        %967 = vmatpush1.bf16.msra.mxu0 0
        %968 = vmatprep.subr.bf16.mxu0 0
        %969 = vmatpush1.bf16.msra.mxu0 0
        %970 = vmatprep.subr.bf16.mxu0 0
        %971 = vmatpush1.bf16.msra.mxu0 0
        %972 = vmatprep.subr.bf16.mxu0 0
        %973 = vmatpush1.bf16.msra.mxu0 0
        %974 = vmatprep.subr.bf16.mxu0 0
        %975 = vmatpush1.bf16.msra.mxu0 0
        %976 = vmatprep.subr.bf16.mxu0 0
        %977 = vmatpush1.bf16.msra.mxu0 0
        %978 = vmatprep.subr.bf16.mxu0 0
        %979 = vmatpush1.bf16.msra.mxu0 0
        %980 = vmatprep.subr.bf16.mxu0 0
        %981 = vmatpush1.bf16.msra.mxu0 0
        %982 = vmatprep.subr.bf16.mxu0 0
        %983 = vmatpush1.bf16.msra.mxu0 0
        %984 = vmatprep.subr.bf16.mxu0 0
        %985 = vmatpush1.bf16.msra.mxu0 0
        %986 = vmatprep.subr.bf16.mxu0 0
        %987 = vmatpush1.bf16.msra.mxu0 0
        %988 = vmatprep.subr.bf16.mxu0 0
        %989 = vmatpush1.bf16.msra.mxu0 0
        %990 = vmatprep.subr.bf16.mxu0 0
        %991 = vmatpush1.bf16.msra.mxu0 0
        %992 = vmatprep.mubr.bf16.mxu0 0
        %993 = vmatmul.mubr.bf16.gmra.mrb[0].mxu0 %v955
        %v994 = vpop.f32.mrb[0].mxu0
        %v995 = vadd.f32 0.0, %v994
        %v996 = vpop.f32.mrb[0].mxu0
        %v997 = vpop.f32.mrb[0].mxu0
        %v998 = vpop.f32.mrb[0].mxu0
        %999 = vdwg.mxu0
        %v1000 = vadd.f32 %v943, %v995
        %v1001 = vrcp.pop %v947
        %v1002 = vmul.f32 %v1000, %v1001
        %v1003 = vpack.c.bf16 %v1002, %v1002
        %v1005 = vunpack.c.l.b16 %v1003
        %v1006 = vpack.c.b16 %v1005, %v1005
        %1007 = vrot.lane.b32.xlu0 %v1006, 8
        %v1008 = vpop.permute.xlu0 %1007
        %vm1010 = vcmask 126016
        %1011 = vst.msk [vmem:[#allocation5] sm:$0xf] %vm1010, %v1008
        %v1012 = vld [vmem:[#allocation2] sm:$0xf]
        %v1013 = vld [vmem:[#allocation3] sm:$0xf]
        %1014 = vrot.lane.b32.xlu0 %v760, 112
        %v1015 = vpop.permute.xlu0 %1014
        %v1017 = vunpack.c.l.b16 %v1012
        %v1018 = vpack.c.b16 %v1017, %v1017
        %1019 = vrot.lane.b32.xlu0 %v1018, 112
        %v1020 = vpop.permute.xlu0 %1019
        %v1022 = vsel %vm763, %v1015, 0
        %v1025 = vsel %vm763, %v1020, 0
        %1027 = vmatprep.subr.bf16.mxu0 0
        %1028 = vmatpush1.bf16.xpose.msra.mxu0 %v1025
        %1029 = vmatprep.subr.bf16.mxu0 0
        %1030 = vmatpush1.bf16.xpose.msra.mxu0 0
        %1031 = vmatprep.subr.bf16.mxu0 0
        %1032 = vmatpush1.bf16.xpose.msra.mxu0 0
        %1033 = vmatprep.subr.bf16.mxu0 0
        %1034 = vmatpush1.bf16.xpose.msra.mxu0 0
        %1035 = vmatprep.subr.bf16.mxu0 0
        %1036 = vmatpush1.bf16.xpose.msra.mxu0 0
        %1037 = vmatprep.subr.bf16.mxu0 0
        %1038 = vmatpush1.bf16.xpose.msra.mxu0 0
        %1039 = vmatprep.subr.bf16.mxu0 0
        %1040 = vmatpush1.bf16.xpose.msra.mxu0 0
        %1041 = vmatprep.subr.bf16.mxu0 0
        %1042 = vmatpush1.bf16.xpose.msra.mxu0 0
        %1043 = vmatprep.subr.bf16.mxu0 0
        %1044 = vmatpush1.bf16.xpose.msra.mxu0 0
        %1045 = vmatprep.subr.bf16.mxu0 0
        %1046 = vmatpush1.bf16.xpose.msra.mxu0 0
        %1047 = vmatprep.subr.bf16.mxu0 0
        %1048 = vmatpush1.bf16.xpose.msra.mxu0 0
        %1049 = vmatprep.subr.bf16.mxu0 0
        %1050 = vmatpush1.bf16.xpose.msra.mxu0 0
        %1051 = vmatprep.subr.bf16.mxu0 0
        %1052 = vmatpush1.bf16.xpose.msra.mxu0 0
        %1053 = vmatprep.subr.bf16.mxu0 0
        %1054 = vmatpush1.bf16.xpose.msra.mxu0 0
        %1055 = vmatprep.subr.bf16.mxu0 0
        %1056 = vmatpush1.bf16.xpose.msra.mxu0 0
        %1057 = vmatprep.subr.bf16.mxu0 0
        %1058 = vmatpush1.bf16.xpose.msra.mxu0 0
        %1059 = vmatprep.mubr.bf16.mxu0 0
        %1060 = vmatmul.mubr.bf16.gmra.mrb[0].mxu0 %v1022
        %v1061 = vpop.f32.mrb[0].mxu0
        %v1062 = vadd.f32 0.0, %v1061
        %v1063 = vpop.f32.mrb[0].mxu0
        %v1064 = vpop.f32.mrb[0].mxu0
        %v1065 = vpop.f32.mrb[0].mxu0
        %1066 = vdwg.mxu0
        %v1067 = vsel %vm763, %v1062, -inf
        %1068 = vmax.xlane.f32.xlu0 %v1067
        %v1069 = vpop.xlane.xlu0 %1068
        %v1070 = vsub.f32 -inf, %v1069
        %v1071 = vmul.f32 %v1070, 1.442695
        %v1072 = vpow.pop %v1071
        %v1073 = vsub.f32 %v1062, %v1069
        %v1074 = vmul.f32 %v1073, 1.442695
        %v1075 = vpow.pop %v1074
        %v1076 = vmul.f32 %v1072, 0.0
        %v1077 = vsel %vm763, %v1075, 0.0
        %1078 = vadd.xlane.f32.xlu0 %v1077
        %v1079 = vpop.xlane.xlu0 %1078
        %v1080 = vadd.f32 %v1076, %v1079
        %v1081 = vpack.c.bf16 %v1075, %v1075
        %v1083 = vunpack.c.l.b16 %v1013
        %v1084 = vpack.c.b16 %v1083, %v1083
        %1085 = vrot.lane.b32.xlu0 %v1084, 112
        %v1086 = vpop.permute.xlu0 %1085
        %v1088 = vsel %vm763, %v1081, 0
        %v1091 = vsel %vm828, %v1086, 0
        %1093 = vmatprep.subr.bf16.mxu0 0
        %1094 = vmatpush1.bf16.msra.mxu0 %v1091
        %1095 = vmatprep.subr.bf16.mxu0 0
        %1096 = vmatpush1.bf16.msra.mxu0 0
        %1097 = vmatprep.subr.bf16.mxu0 0
        %1098 = vmatpush1.bf16.msra.mxu0 0
        %1099 = vmatprep.subr.bf16.mxu0 0
        %1100 = vmatpush1.bf16.msra.mxu0 0
        %1101 = vmatprep.subr.bf16.mxu0 0
        %1102 = vmatpush1.bf16.msra.mxu0 0
        %1103 = vmatprep.subr.bf16.mxu0 0
        %1104 = vmatpush1.bf16.msra.mxu0 0
        %1105 = vmatprep.subr.bf16.mxu0 0
        %1106 = vmatpush1.bf16.msra.mxu0 0
        %1107 = vmatprep.subr.bf16.mxu0 0
        %1108 = vmatpush1.bf16.msra.mxu0 0
        %1109 = vmatprep.subr.bf16.mxu0 0
        %1110 = vmatpush1.bf16.msra.mxu0 0
        %1111 = vmatprep.subr.bf16.mxu0 0
        %1112 = vmatpush1.bf16.msra.mxu0 0
        %1113 = vmatprep.subr.bf16.mxu0 0
        %1114 = vmatpush1.bf16.msra.mxu0 0
        %1115 = vmatprep.subr.bf16.mxu0 0
        %1116 = vmatpush1.bf16.msra.mxu0 0
        %1117 = vmatprep.subr.bf16.mxu0 0
        %1118 = vmatpush1.bf16.msra.mxu0 0
        %1119 = vmatprep.subr.bf16.mxu0 0
        %1120 = vmatpush1.bf16.msra.mxu0 0
        %1121 = vmatprep.subr.bf16.mxu0 0
        %1122 = vmatpush1.bf16.msra.mxu0 0
        %1123 = vmatprep.subr.bf16.mxu0 0
        %1124 = vmatpush1.bf16.msra.mxu0 0
        %1125 = vmatprep.mubr.bf16.mxu0 0
        %1126 = vmatmul.mubr.bf16.gmra.mrb[0].mxu0 %v1088
        %v1127 = vpop.f32.mrb[0].mxu0
        %v1128 = vadd.f32 0.0, %v1127
        %v1129 = vpop.f32.mrb[0].mxu0
        %v1130 = vpop.f32.mrb[0].mxu0
        %v1131 = vpop.f32.mrb[0].mxu0
        %1132 = vdwg.mxu0
        %v1133 = vadd.f32 %v1076, %v1128
        %v1134 = vrcp.pop %v1080
        %v1135 = vmul.f32 %v1133, %v1134
        %v1136 = vpack.c.bf16 %v1135, %v1135
        %v1138 = vunpack.c.l.b16 %v1136
        %v1139 = vpack.c.b16 %v1138, %v1138
        %1140 = vrot.lane.b32.xlu0 %v1139, 16
        %v1141 = vpop.permute.xlu0 %1140
        %vm1143 = vcmask 191616
        %1144 = vst.msk [vmem:[#allocation5] sm:$0xf] %vm1143, %v1141
        %v1145 = vld [vmem:[#allocation2] sm:$0xf]
        %v1146 = vld [vmem:[#allocation3] sm:$0xf]
        %1147 = vrot.lane.b32.xlu0 %v760, 104
        %v1148 = vpop.permute.xlu0 %1147
        %v1150 = vunpack.c.l.b16 %v1145
        %v1151 = vpack.c.b16 %v1150, %v1150
        %1152 = vrot.lane.b32.xlu0 %v1151, 104
        %v1153 = vpop.permute.xlu0 %1152
        %v1155 = vsel %vm763, %v1148, 0
        %v1158 = vsel %vm763, %v1153, 0
        %1160 = vmatprep.subr.bf16.mxu0 0
        %1161 = vmatpush1.bf16.xpose.msra.mxu0 %v1158
        %1162 = vmatprep.subr.bf16.mxu0 0
        %1163 = vmatpush1.bf16.xpose.msra.mxu0 0
        %1164 = vmatprep.subr.bf16.mxu0 0
        %1165 = vmatpush1.bf16.xpose.msra.mxu0 0
        %1166 = vmatprep.subr.bf16.mxu0 0
        %1167 = vmatpush1.bf16.xpose.msra.mxu0 0
        %1168 = vmatprep.subr.bf16.mxu0 0
        %1169 = vmatpush1.bf16.xpose.msra.mxu0 0
        %1170 = vmatprep.subr.bf16.mxu0 0
        %1171 = vmatpush1.bf16.xpose.msra.mxu0 0
        %1172 = vmatprep.subr.bf16.mxu0 0
        %1173 = vmatpush1.bf16.xpose.msra.mxu0 0
        %1174 = vmatprep.subr.bf16.mxu0 0
        %1175 = vmatpush1.bf16.xpose.msra.mxu0 0
        %1176 = vmatprep.subr.bf16.mxu0 0
        %1177 = vmatpush1.bf16.xpose.msra.mxu0 0
        %1178 = vmatprep.subr.bf16.mxu0 0
        %1179 = vmatpush1.bf16.xpose.msra.mxu0 0
        %1180 = vmatprep.subr.bf16.mxu0 0
        %1181 = vmatpush1.bf16.xpose.msra.mxu0 0
        %1182 = vmatprep.subr.bf16.mxu0 0
        %1183 = vmatpush1.bf16.xpose.msra.mxu0 0
        %1184 = vmatprep.subr.bf16.mxu0 0
        %1185 = vmatpush1.bf16.xpose.msra.mxu0 0
        %1186 = vmatprep.subr.bf16.mxu0 0
        %1187 = vmatpush1.bf16.xpose.msra.mxu0 0
        %1188 = vmatprep.subr.bf16.mxu0 0
        %1189 = vmatpush1.bf16.xpose.msra.mxu0 0
        %1190 = vmatprep.subr.bf16.mxu0 0
        %1191 = vmatpush1.bf16.xpose.msra.mxu0 0
        %1192 = vmatprep.mubr.bf16.mxu0 0
        %1193 = vmatmul.mubr.bf16.gmra.mrb[0].mxu0 %v1155
        %v1194 = vpop.f32.mrb[0].mxu0
        %v1195 = vadd.f32 0.0, %v1194
        %v1196 = vpop.f32.mrb[0].mxu0
        %v1197 = vpop.f32.mrb[0].mxu0
        %v1198 = vpop.f32.mrb[0].mxu0
        %1199 = vdwg.mxu0
        %v1200 = vsel %vm763, %v1195, -inf
        %1201 = vmax.xlane.f32.xlu0 %v1200
        %v1202 = vpop.xlane.xlu0 %1201
        %v1203 = vsub.f32 -inf, %v1202
        %v1204 = vmul.f32 %v1203, 1.442695
        %v1205 = vpow.pop %v1204
        %v1206 = vsub.f32 %v1195, %v1202
        %v1207 = vmul.f32 %v1206, 1.442695
        %v1208 = vpow.pop %v1207
        %v1209 = vmul.f32 %v1205, 0.0
        %v1210 = vsel %vm763, %v1208, 0.0
        %1211 = vadd.xlane.f32.xlu0 %v1210
        %v1212 = vpop.xlane.xlu0 %1211
        %v1213 = vadd.f32 %v1209, %v1212
        %v1214 = vpack.c.bf16 %v1208, %v1208
        %v1216 = vunpack.c.l.b16 %v1146
        %v1217 = vpack.c.b16 %v1216, %v1216
        %1218 = vrot.lane.b32.xlu0 %v1217, 104
        %v1219 = vpop.permute.xlu0 %1218
        %v1221 = vsel %vm763, %v1214, 0
        %v1224 = vsel %vm828, %v1219, 0
        %1226 = vmatprep.subr.bf16.mxu0 0
        %1227 = vmatpush1.bf16.msra.mxu0 %v1224
        %1228 = vmatprep.subr.bf16.mxu0 0
        %1229 = vmatpush1.bf16.msra.mxu0 0
        %1230 = vmatprep.subr.bf16.mxu0 0
        %1231 = vmatpush1.bf16.msra.mxu0 0
        %1232 = vmatprep.subr.bf16.mxu0 0
        %1233 = vmatpush1.bf16.msra.mxu0 0
        %1234 = vmatprep.subr.bf16.mxu0 0
        %1235 = vmatpush1.bf16.msra.mxu0 0
        %1236 = vmatprep.subr.bf16.mxu0 0
        %1237 = vmatpush1.bf16.msra.mxu0 0
        %1238 = vmatprep.subr.bf16.mxu0 0
        %1239 = vmatpush1.bf16.msra.mxu0 0
        %1240 = vmatprep.subr.bf16.mxu0 0
        %1241 = vmatpush1.bf16.msra.mxu0 0
        %1242 = vmatprep.subr.bf16.mxu0 0
        %1243 = vmatpush1.bf16.msra.mxu0 0
        %1244 = vmatprep.subr.bf16.mxu0 0
        %1245 = vmatpush1.bf16.msra.mxu0 0
        %1246 = vmatprep.subr.bf16.mxu0 0
        %1247 = vmatpush1.bf16.msra.mxu0 0
        %1248 = vmatprep.subr.bf16.mxu0 0
        %1249 = vmatpush1.bf16.msra.mxu0 0
        %1250 = vmatprep.subr.bf16.mxu0 0
        %1251 = vmatpush1.bf16.msra.mxu0 0
        %1252 = vmatprep.subr.bf16.mxu0 0
        %1253 = vmatpush1.bf16.msra.mxu0 0
        %1254 = vmatprep.subr.bf16.mxu0 0
        %1255 = vmatpush1.bf16.msra.mxu0 0
        %1256 = vmatprep.subr.bf16.mxu0 0
        %1257 = vmatpush1.bf16.msra.mxu0 0
        %1258 = vmatprep.mubr.bf16.mxu0 0
        %1259 = vmatmul.mubr.bf16.gmra.mrb[0].mxu0 %v1221
        %v1260 = vpop.f32.mrb[0].mxu0
        %v1261 = vadd.f32 0.0, %v1260
        %v1262 = vpop.f32.mrb[0].mxu0
        %v1263 = vpop.f32.mrb[0].mxu0
        %v1264 = vpop.f32.mrb[0].mxu0
        %1265 = vdwg.mxu0
        %v1266 = vadd.f32 %v1209, %v1261
        %v1267 = vrcp.pop %v1213
        %v1268 = vmul.f32 %v1266, %v1267
        %v1269 = vpack.c.bf16 %v1268, %v1268
        %v1271 = vunpack.c.l.b16 %v1269
        %v1272 = vpack.c.b16 %v1271, %v1271
        %1273 = vrot.lane.b32.xlu0 %v1272, 24
        %v1274 = vpop.permute.xlu0 %1273
        %vm1276 = vcmask 257216
        %1277 = vst.msk [vmem:[#allocation5] sm:$0xf] %vm1276, %v1274
        %v1278 = vld [vmem:[#allocation5] sm:$0xf]
        %v1279 = vld [vmem:[#allocation11] sm:$0xf]
        %v1280 = vld [vmem:[#allocation11 + $0x4] sm:$0xf]
        %v1281 = vld [vmem:[#allocation11 + $0x8] sm:$0xf]
        %v1282 = vld [vmem:[#allocation11 + $0xc] sm:$0xf]
        %v1283 = vld [vmem:[#allocation12] sm:$0x1]
        %v1285 = vlaneseq
        %v1286 = vshrl.u32 %v1285, 7
        %v1287 = vsub.s32 0, %v1286
        %v1288 = vrot.slane %v1283, %v1287
        %v1294 = vunpack.c.l.b16 %v1279
        %v1295 = vunpack.c.l.b16 %v1280
        %v1296 = vunpack.c.l.b16 %v1281
        %v1297 = vunpack.c.l.b16 %v1282
        %v1298 = vpack.c.b16 %v1295, %v1294
        %v1299 = vpack.c.b16 %v1297, %v1296
        %v1303 = vsel %vm715, %v1278, 0
        %1305 = vmatprep.subr.bf16.mxu0 0
        %1306 = vmatpush1.bf16.msra.mxu0 %v1298
        %1307 = vmatprep.subr.bf16.mxu0 0
        %1308 = vmatpush1.bf16.msra.mxu0 %v1299
        %1309 = vmatprep.subr.bf16.mxu0 0
        %1310 = vmatpush1.bf16.msra.mxu0 0
        %1311 = vmatprep.subr.bf16.mxu0 0
        %1312 = vmatpush1.bf16.msra.mxu0 0
        %1313 = vmatprep.subr.bf16.mxu0 0
        %1314 = vmatpush1.bf16.msra.mxu0 0
        %1315 = vmatprep.subr.bf16.mxu0 0
        %1316 = vmatpush1.bf16.msra.mxu0 0
        %1317 = vmatprep.subr.bf16.mxu0 0
        %1318 = vmatpush1.bf16.msra.mxu0 0
        %1319 = vmatprep.subr.bf16.mxu0 0
        %1320 = vmatpush1.bf16.msra.mxu0 0
        %1321 = vmatprep.subr.bf16.mxu0 0
        %1322 = vmatpush1.bf16.msra.mxu0 0
        %1323 = vmatprep.subr.bf16.mxu0 0
        %1324 = vmatpush1.bf16.msra.mxu0 0
        %1325 = vmatprep.subr.bf16.mxu0 0
        %1326 = vmatpush1.bf16.msra.mxu0 0
        %1327 = vmatprep.subr.bf16.mxu0 0
        %1328 = vmatpush1.bf16.msra.mxu0 0
        %1329 = vmatprep.subr.bf16.mxu0 0
        %1330 = vmatpush1.bf16.msra.mxu0 0
        %1331 = vmatprep.subr.bf16.mxu0 0
        %1332 = vmatpush1.bf16.msra.mxu0 0
        %1333 = vmatprep.subr.bf16.mxu0 0
        %1334 = vmatpush1.bf16.msra.mxu0 0
        %1335 = vmatprep.subr.bf16.mxu0 0
        %1336 = vmatpush1.bf16.msra.mxu0 0
        %1337 = vmatprep.mubr.bf16.mxu0 0
        %1338 = vmatmul.mubr.bf16.gmra.mrb[0].mxu0 %v1303
        %v1339 = vpop.f32.mrb[0].mxu0
        %v1340 = vadd.f32 %v1288, %v1339
        %v1341 = vpop.f32.mrb[0].mxu0
        %v1342 = vpop.f32.mrb[0].mxu0
        %v1343 = vpop.f32.mrb[0].mxu0
        %1344 = vdwg.mxu0
        %v1345 = vadd.f32 %v686, %v1340
        %v1346 = vld [vmem:[#allocation14] sm:$0x1]
        %v1347 = vld [vmem:[%s10] sm:$0x1]
        %v1348 = vsel %vm715, %v1345, 0.0
        %1349 = vadd.xlane.f32.xlu0 %v1348
        %v1350 = vpop.xlane.xlu0 %1349
        %v1351 = vrcp.pop 32.0
        %v1352 = vmul.f32 %v1350, %v1351
        %v1353 = vsub.f32 %v1345, %v1352
        %v1354 = vmul.f32 %v1353, %v1353
        %v1355 = vsel %vm715, %v1354, 0.0
        %1356 = vadd.xlane.f32.xlu0 %v1355
        %v1357 = vpop.xlane.xlu0 %1356
        %v1358 = vmul.f32 %v1357, %v1351
        %v1359 = vadd.f32 %v1358, 1e-05
        %v1360 = vrsqrt.pop %v1359
        %v1361 = vmul.f32 %v1353, %v1360
        %v1363 = vlaneseq
        %v1364 = vshrl.u32 %v1363, 7
        %v1365 = vsub.s32 0, %v1364
        %v1366 = vrot.slane %v1346, %v1365
        %v1368 = vmul.f32 %v1361, %v1366
        %v1370 = vlaneseq
        %v1371 = vshrl.u32 %v1370, 7
        %v1372 = vsub.s32 0, %v1371
        %v1373 = vrot.slane %v1347, %v1372
        %v1375 = vadd.f32 %v1368, %v1373
        %v1376 = vpack.c.bf16 %v1375, %v1375
        %v1377 = vld [vmem:[%s11] sm:$0xf]
        %v1378 = vld [vmem:[%s11 + $0x4] sm:$0xf]
        %v1379 = vld [vmem:[%s11 + $0x8] sm:$0xf]
        %v1380 = vld [vmem:[%s11 + $0xc] sm:$0xf]
        %v1381 = vld [vmem:[%s12] sm:$0x1]
        %v1383 = vlaneseq
        %v1384 = vshrl.u32 %v1383, 7
        %v1385 = vsub.s32 0, %v1384
        %v1386 = vrot.slane %v1381, %v1385
        %v1392 = vunpack.c.l.b16 %v1377
        %v1393 = vunpack.c.l.b16 %v1378
        %v1394 = vunpack.c.l.b16 %v1379
        %v1395 = vunpack.c.l.b16 %v1380
        %v1396 = vpack.c.b16 %v1393, %v1392
        %v1397 = vpack.c.b16 %v1395, %v1394
        %v1401 = vsel %vm715, %v1376, 0
        %1403 = vmatprep.subr.bf16.mxu0 0
        %1404 = vmatpush1.bf16.msra.mxu0 %v1396
        %1405 = vmatprep.subr.bf16.mxu0 0
        %1406 = vmatpush1.bf16.msra.mxu0 %v1397
        %1407 = vmatprep.subr.bf16.mxu0 0
        %1408 = vmatpush1.bf16.msra.mxu0 0
        %1409 = vmatprep.subr.bf16.mxu0 0
        %1410 = vmatpush1.bf16.msra.mxu0 0
        %1411 = vmatprep.subr.bf16.mxu0 0
        %1412 = vmatpush1.bf16.msra.mxu0 0
        %1413 = vmatprep.subr.bf16.mxu0 0
        %1414 = vmatpush1.bf16.msra.mxu0 0
        %1415 = vmatprep.subr.bf16.mxu0 0
        %1416 = vmatpush1.bf16.msra.mxu0 0
        %1417 = vmatprep.subr.bf16.mxu0 0
        %1418 = vmatpush1.bf16.msra.mxu0 0
        %1419 = vmatprep.subr.bf16.mxu0 0
        %1420 = vmatpush1.bf16.msra.mxu0 0
        %1421 = vmatprep.subr.bf16.mxu0 0
        %1422 = vmatpush1.bf16.msra.mxu0 0
        %1423 = vmatprep.subr.bf16.mxu0 0
        %1424 = vmatpush1.bf16.msra.mxu0 0
        %1425 = vmatprep.subr.bf16.mxu0 0
        %1426 = vmatpush1.bf16.msra.mxu0 0
        %1427 = vmatprep.subr.bf16.mxu0 0
        %1428 = vmatpush1.bf16.msra.mxu0 0
        %1429 = vmatprep.subr.bf16.mxu0 0
        %1430 = vmatpush1.bf16.msra.mxu0 0
        %1431 = vmatprep.subr.bf16.mxu0 0
        %1432 = vmatpush1.bf16.msra.mxu0 0
        %1433 = vmatprep.subr.bf16.mxu0 0
        %1434 = vmatpush1.bf16.msra.mxu0 0
        %1435 = vmatprep.mubr.bf16.mxu0 0
        %1436 = vmatmul.mubr.bf16.gmra.mrb[0].mxu0 %v1401
        %v1437 = vpop.f32.mrb[0].mxu0
        %v1438 = vadd.f32 %v1386, %v1437
        %v1439 = vpop.f32.mrb[0].mxu0
        %v1440 = vpop.f32.mrb[0].mxu0
        %v1441 = vpop.f32.mrb[0].mxu0
        %1442 = vdwg.mxu0
        %v1443 = vmax.f32 %v1438, 0.0
        %v1444 = vpack.c.bf16 %v1443, %v1443
        %v1445 = vld [vmem:[%s13] sm:$0xf]
        %v1446 = vld [vmem:[%s13 + $0x4] sm:$0xf]
        %v1447 = vld [vmem:[%s13 + $0x8] sm:$0xf]
        %v1448 = vld [vmem:[%s13 + $0xc] sm:$0xf]
        %v1449 = vld [vmem:[%s13 + $0x10] sm:$0xf]
        %v1450 = vld [vmem:[%s13 + $0x14] sm:$0xf]
        %v1451 = vld [vmem:[%s13 + $0x18] sm:$0xf]
        %v1452 = vld [vmem:[%s13 + $0x1c] sm:$0xf]
        %v1453 = vld [vmem:[%s14] sm:$0x1]
        %v1455 = vlaneseq
        %v1456 = vshrl.u32 %v1455, 7
        %v1457 = vsub.s32 0, %v1456
        %v1458 = vrot.slane %v1453, %v1457
        %v1468 = vunpack.c.l.b16 %v1445
        %v1469 = vunpack.c.l.b16 %v1446
        %v1470 = vunpack.c.l.b16 %v1447
        %v1471 = vunpack.c.l.b16 %v1448
        %v1472 = vunpack.c.l.b16 %v1449
        %v1473 = vunpack.c.l.b16 %v1450
        %v1474 = vunpack.c.l.b16 %v1451
        %v1475 = vunpack.c.l.b16 %v1452
        %v1476 = vpack.c.b16 %v1469, %v1468
        %v1477 = vpack.c.b16 %v1471, %v1470
        %v1478 = vpack.c.b16 %v1473, %v1472
        %v1479 = vpack.c.b16 %v1475, %v1474
        %vm1484 = vcmask 523264
        %v1486 = vsel %vm1484, %v1444, 0
        %1488 = vmatprep.subr.bf16.mxu0 0
        %1489 = vmatpush1.bf16.msra.mxu0 %v1476
        %1490 = vmatprep.subr.bf16.mxu0 0
        %1491 = vmatpush1.bf16.msra.mxu0 %v1477
        %1492 = vmatprep.subr.bf16.mxu0 0
        %1493 = vmatpush1.bf16.msra.mxu0 %v1478
        %1494 = vmatprep.subr.bf16.mxu0 0
        %1495 = vmatpush1.bf16.msra.mxu0 %v1479
        %1496 = vmatprep.subr.bf16.mxu0 0
        %1497 = vmatpush1.bf16.msra.mxu0 0
        %1498 = vmatprep.subr.bf16.mxu0 0
        %1499 = vmatpush1.bf16.msra.mxu0 0
        %1500 = vmatprep.subr.bf16.mxu0 0
        %1501 = vmatpush1.bf16.msra.mxu0 0
        %1502 = vmatprep.subr.bf16.mxu0 0
        %1503 = vmatpush1.bf16.msra.mxu0 0
        %1504 = vmatprep.subr.bf16.mxu0 0
        %1505 = vmatpush1.bf16.msra.mxu0 0
        %1506 = vmatprep.subr.bf16.mxu0 0
        %1507 = vmatpush1.bf16.msra.mxu0 0
        %1508 = vmatprep.subr.bf16.mxu0 0
        %1509 = vmatpush1.bf16.msra.mxu0 0
        %1510 = vmatprep.subr.bf16.mxu0 0
        %1511 = vmatpush1.bf16.msra.mxu0 0
        %1512 = vmatprep.subr.bf16.mxu0 0
        %1513 = vmatpush1.bf16.msra.mxu0 0
        %1514 = vmatprep.subr.bf16.mxu0 0
        %1515 = vmatpush1.bf16.msra.mxu0 0
        %1516 = vmatprep.subr.bf16.mxu0 0
        %1517 = vmatpush1.bf16.msra.mxu0 0
        %1518 = vmatprep.subr.bf16.mxu0 0
        %1519 = vmatpush1.bf16.msra.mxu0 0
        %1520 = vmatprep.mubr.bf16.mxu0 0
        %1521 = vmatmul.mubr.bf16.gmra.mrb[0].mxu0 %v1486
        %v1522 = vpop.f32.mrb[0].mxu0
        %v1523 = vadd.f32 %v1458, %v1522
        %v1524 = vpop.f32.mrb[0].mxu0
        %v1525 = vpop.f32.mrb[0].mxu0
        %v1526 = vpop.f32.mrb[0].mxu0
        %1527 = vdwg.mxu0
        %v1528 = vadd.f32 %v1345, %v1523
        %1529 = vst.msk [vmem:[%s564] sm:$0xff] %vm715, %v1528
        %s1530 = sand.u32 %s374, 1
        %s1531 = scalar_lea.sflag [#allocation8], %s1530
        %s1532 = sand.u32 %s374, 1
        %s1533 = smul.addr %s1532, 8
        %s1534 = scalar_lea.vmem [#allocation15], %s1533
        // Predicated region
        $region105: #{tpu_custom_call.1} parent=79 // pred_check
          %p1535 = pneg %p384
        $region106: #{tpu_custom_call.1} parent=79 // pred_check_branch
          %1537 = sbr.rel (%p1535) target = $region108
        $region107: #{tpu_custom_call.1} parent=79 // pred_region
          %s1539 = ssub.s32 128, 128
          %1540 = vsyncadd %s1531, %s1539
          %s1541 = sadd.s32 %s37, %s36
          %s1542 = smul.addr %s1541, 128
          %s1543 = scalar_lea.hbm %s15, %s1542
          %s1545 = sshll.u32 %s1534, 4
          %s1546 = int_to_ptr.vmem [resolvable:$true] %s1545
          %1548 = dma.vmem_to_hbm [thread:$0]  %s1546, 128, %s1543, %s1531
        $region108: #{tpu_custom_call.1} parent=79 // pred_fallthru
          _
      $region80: #{tpu_custom_call.1} parent=5 // pred_fallthru
        _
      %p1549 = scmp.le.s32.totalorder 2, %s27
      // Predicated region
      $region109: #{tpu_custom_call.1} parent=5 // pred_check
        %p1550 = pneg %p1549
      $region110: #{tpu_custom_call.1} parent=5 // pred_check_branch
        %1552 = sbr.rel (%p1550) target = $region112
      $region111: #{tpu_custom_call.1} parent=5 // pred_region
        %s1553 = ssub.s32 %s27, 2
        // Predicated region
        $region113: #{tpu_custom_call.1} parent=111 // pred_check
          %p1554 = pneg %p390
        $region114: #{tpu_custom_call.1} parent=111 // pred_check_branch
          %1556 = sbr.rel (%p1554) target = $region116
        $region115: #{tpu_custom_call.1} parent=111 // pred_region
          %s1557 = sand.u32 %s375, 1
          %s1558 = scalar_lea.sflag [#allocation8], %s1557
          %s1559 = sand.u32 %s375, 1
          %s1560 = smul.addr %s1559, 8
          %s1561 = scalar_lea.vmem [#allocation15], %s1560
          %1562 = dma.done %s1558, 128
        $region116: #{tpu_custom_call.1} parent=111 // pred_fallthru
          _
      $region112: #{tpu_custom_call.1} parent=5 // pred_fallthru
        _
    $region6: #{tpu_custom_call.1} parent=1 // loop_footer
      %s31 = sadd.s32 1, %s27
    $region7: #{tpu_custom_call.1} parent=1 // loop_footer_branch
      %26 = sbr.rel target = $region3
    $region8: #{tpu_custom_call.1} parent=1 // loop_exit
      _
    %1563 = vsyncpa [#allocation7], 1
    %s1564 = scalar_lea.sflag [#allocation7], 1
    %1565 = vsyncpa %s1564, 1
    %1566 = vsyncpa [#allocation10], 1
    %1567 = vsyncpa [#allocation13], 1
    %1568 = vsyncpa [#allocation8], 1
    %s1569 = scalar_lea.sflag [#allocation8], 1
    %1570 = vsyncpa %s1569, 1

</llo_original>
